<compile_context>
chip_gen: v5e
topology: v5e:2x2
jax: 0.10.0
libtpu: 0.0.40
codegen_flags: <defaults>
</compile_context>

<pallas_src>
import functools
import math

import jax
import jax.numpy as jnp
from jax.experimental import pallas as pl
from jax.experimental.pallas import tpu as pltpu


def _round_up(x, m):
    return ((x + m - 1) // m) * m


def _kgram_mlp_kernel(num_inner_layers, inv_d, eps, *refs):
    """refs = x_ref, [gamma, beta, W, b] * L, W_final, b_final, o_ref, h_scratch.

    X tile: (row_tile, feat_pad) bf16.  Weights bf16, LN/bias params f32.
    MXU matmuls use bf16 operands with f32 accumulation; LayerNorm statistics
    are fused one-pass (sum, sum-of-squares) in f32 with inv_d = 1 / D_true.
    """
    x_ref = refs[0]
    o_ref = refs[-2]
    h_ref = refs[-1]
    params = refs[1:-2]

    # Hidden MLP stack: run once per row tile (vocab grid index 0) and cache
    # the result in VMEM scratch (bf16) for every vocab tile of the final GEMM.
    @pl.when(pl.program_id(1) == 0)
    def _():
        h = x_ref[...].astype(jnp.float32)
        for layer in range(num_inner_layers):
            g_ref, beta_ref, w_ref, b_ref = params[4 * layer: 4 * layer + 4]
            # Fused one-pass LayerNorm statistics: var = E[x^2] - E[x]^2.
            s1 = jnp.sum(h, axis=-1, keepdims=True)
            s2 = jnp.sum(h * h, axis=-1, keepdims=True)
            mean = s1 * inv_d
            var = jnp.maximum(s2 * inv_d - mean * mean, 0.0)
            hhat = (h - mean) * jax.lax.rsqrt(var + eps)
            hhat = hhat * g_ref[...] + beta_ref[...]   # padded lanes -> 0
            # Linear(D, D) + ReLU on the MXU (bf16 operands, f32 accumulation).
            h = jnp.dot(hhat.astype(w_ref.dtype), w_ref[...],
                        preferred_element_type=jnp.float32) + b_ref[...]
            h = jnp.maximum(h, 0.0)
            # TODO(synk): Dropout(0.1) is identity in eval mode; training-mode RNG not reproduced.
        h_ref[...] = h.astype(h_ref.dtype)

    wf_ref, bf_ref = params[-2], params[-1]
    logits = jnp.dot(h_ref[...], wf_ref[...],
                     preferred_element_type=jnp.float32) + bf_ref[...]
    o_ref[...] = logits.astype(o_ref.dtype)


def build_contexts(tokens_seq, embedding, k):
    """Plain-JAX glue: per-position k-gram context embeddings, flattened.

    tokens_seq: (seq_len, batch) int32
    returns X: (seq_len * batch, k * embed_size), dtype = embedding.dtype.
    Position t sees tokens t-k ... t-1 (current token excluded), left-padded
    with token id 0 for t < k — same as the PyTorch module.
    """
    seq_len, batch = tokens_seq.shape
    embed_size = embedding.shape[1]
    padded = jnp.concatenate(
        [jnp.zeros((k, batch), tokens_seq.dtype), tokens_seq], axis=0)
    idx = jnp.arange(seq_len)[:, None] + jnp.arange(k)[None, :]   # (seq_len, k)
    contexts = padded[idx]                                        # (seq_len, k, batch)
    ctx_emb = embedding[contexts]                                 # (seq_len, k, batch, E)
    return jnp.transpose(ctx_emb, (0, 2, 1, 3)).reshape(seq_len * batch, k * embed_size)


def kgram_mlp_forward(tokens_seq, params, *, k, row_tile=256, vocab_tile=1024,
                      weight_buffer_count=1):
    """Forward pass: (seq_len, batch) int tokens -> (seq_len, batch, vocab) logits."""
    seq_len, batch = tokens_seq.shape
    embedding = params["embedding"]                 # (vocab, E)
    embed_size = embedding.shape[1]
    feat_dim = k * embed_size
    vocab_size = params["w_final"].shape[1]
    num_inner = len(params["inner"])

    # Lane-dense padding of the feature dim (multiple of 128).
    feat_pad = _round_up(feat_dim, 128)
    fpad = feat_pad - feat_dim

    # Vocab tiling: lane-dense tiles, vocab padded to a multiple of the tile.
    vocab_tile = min(_round_up(vocab_tile, 128), _round_up(vocab_size, 128))
    vocab_pad = _round_up(vocab_size, vocab_tile)
    vpad = vocab_pad - vocab_size

    # Row tiling: MXU-aligned (multiple of 128), as large as the problem allows.
    n_rows = seq_len * batch
    row_tile = _round_up(min(row_tile, _round_up(n_rows, 128)), 128)
    n_rows_pad = _round_up(n_rows, row_tile)

    # TODO(synk): the k-gram gather could move into the kernel (scalar-prefetch
    # token ids + DMA gather from an embedding table in pl.ANY) to avoid
    # materializing X in HBM; kept as plain-JAX glue here.
    x = build_contexts(tokens_seq, embedding.astype(jnp.bfloat16), k)  # (N, D) bf16
    x = jnp.pad(x, ((0, n_rows_pad - n_rows), (0, fpad)))

    # Constant-index (inner) weights: single-buffer to halve weight VMEM.
    wkw = {"pipeline_mode": pl.Buffered(1)} if weight_buffer_count == 1 else {}

    flat_params = []
    in_specs = [pl.BlockSpec((row_tile, feat_pad), lambda i, j: (i, 0))]
    for (g, b, w, bias) in params["inner"]:
        flat_params += [
            jnp.pad(g, (0, fpad)).reshape(1, feat_pad),              # gamma (pad=0)
            jnp.pad(b, (0, fpad)).reshape(1, feat_pad),              # beta  (pad=0)
            jnp.pad(w, ((0, fpad), (0, fpad))).astype(jnp.bfloat16),
            jnp.pad(bias, (0, fpad)).reshape(1, feat_pad),
        ]
        in_specs += [
            pl.BlockSpec((1, feat_pad), lambda i, j: (0, 0), **wkw),
            pl.BlockSpec((1, feat_pad), lambda i, j: (0, 0), **wkw),
            pl.BlockSpec((feat_pad, feat_pad), lambda i, j: (0, 0), **wkw),
            pl.BlockSpec((1, feat_pad), lambda i, j: (0, 0), **wkw),
        ]
    flat_params += [
        jnp.pad(params["w_final"], ((0, fpad), (0, vpad))).astype(jnp.bfloat16),
        jnp.pad(params["b_final"], (0, vpad)).reshape(1, vocab_pad),
    ]
    # Final-layer weight is indexed by the vocab grid axis -> keep default
    # double-buffering so the next vocab tile's DMA overlaps the current matmul.
    in_specs += [
        pl.BlockSpec((feat_pad, vocab_tile), lambda i, j: (0, j)),
        pl.BlockSpec((1, vocab_tile), lambda i, j: (0, j)),
    ]

    grid = (n_rows_pad // row_tile, vocab_pad // vocab_tile)

    # Rough VMEM footprint -> scoped limit with headroom (clamped).
    wb = weight_buffer_count
    est_bytes = (2 * row_tile * feat_pad * 2                                   # X (dbl buf, bf16)
                 + num_inner * wb * (feat_pad * feat_pad * 2 + 3 * feat_pad * 4)
                 + 2 * (feat_pad * vocab_tile * 2 + vocab_tile * 4)            # final W/b (dbl buf)
                 + 2 * row_tile * vocab_tile * 4                               # output (dbl buf, f32)
                 + row_tile * feat_pad * 2)                                    # hidden scratch (bf16)
    vmem_limit = int(min(max(32 * 1024 * 1024, 1.3 * est_bytes), 100 * 1024 * 1024))

    kernel = functools.partial(_kgram_mlp_kernel, num_inner, 1.0 / feat_dim, 1e-5)
    out = pl.pallas_call(
        kernel,
        # TODO(synk): logits could be emitted as bf16 to halve HBM writeback if
        # the downstream loss tolerates it; kept f32 to match the module.
        out_shape=jax.ShapeDtypeStruct((n_rows_pad, vocab_pad), jnp.float32),
        grid_spec=pltpu.PrefetchScalarGridSpec(
            num_scalar_prefetch=0,
            grid=grid,
            in_specs=in_specs,
            out_specs=pl.BlockSpec((row_tile, vocab_tile), lambda i, j: (i, j)),
            scratch_shapes=[pltpu.VMEM((row_tile, feat_pad), jnp.bfloat16)],
        ),
        compiler_params=pltpu.CompilerParams(
            dimension_semantics=("parallel", "arbitrary"),
            vmem_limit_bytes=vmem_limit),
    )(x, *flat_params)
    return out[:n_rows, :vocab_size].reshape(seq_len, batch, vocab_size)


def kgram_mlp_forward_safe(tokens_seq, params, *, k, row_tile=256, vocab_tile=1024):
    """Prefer single-buffered inner weights; fall back to default double
    buffering if this jax build rejects pl.Buffered(1) as a pipeline_mode."""
    try:
        out = kgram_mlp_forward(tokens_seq, params, k=k, row_tile=row_tile,
                                vocab_tile=vocab_tile, weight_buffer_count=1)
        return jax.block_until_ready(out)
    except Exception:
        out = kgram_mlp_forward(tokens_seq, params, k=k, row_tile=row_tile,
                                vocab_tile=vocab_tile, weight_buffer_count=2)
        return jax.block_until_ready(out)


def init_params(key, vocab_size, k, embed_size, num_inner_layers):
    """Deterministic parameter init (shapes mirror the PyTorch module)."""
    feat_dim = k * embed_size

    def xavier_uniform(kk, fan_in, fan_out):
        limit = math.sqrt(6.0 / (fan_in + fan_out))
        return jax.random.uniform(kk, (fan_in, fan_out), jnp.float32, -limit, limit)

    keys = jax.random.split(key, num_inner_layers + 2)
    embedding = jax.random.normal(keys[0], (vocab_size, embed_size), jnp.float32)
    inner = []
    for layer in range(num_inner_layers):
        gamma = jnp.ones((feat_dim,), jnp.float32)     # LayerNorm weight
        beta = jnp.zeros((feat_dim,), jnp.float32)     # LayerNorm bias
        w = xavier_uniform(keys[1 + layer], feat_dim, feat_dim)  # stored (in, out)
        b = jnp.zeros((feat_dim,), jnp.float32)
        inner.append((gamma, beta, w, b))
    w_final = xavier_uniform(keys[-1], feat_dim, vocab_size)     # stored (in, out)
    b_final = jnp.zeros((vocab_size,), jnp.float32)
    return {"embedding": embedding, "inner": inner,
            "w_final": w_final, "b_final": b_final}


def reference_forward(tokens_seq, params, *, k):
    """Plain-JAX reference mirroring the kernel's mixed precision
    (bf16 matmul operands, f32 accumulation, f32 LayerNorm, eval mode)."""
    x = build_contexts(tokens_seq, params["embedding"].astype(jnp.bfloat16), k)
    h = x.astype(jnp.float32)
    inv_d = 1.0 / h.shape[-1]
    for (g, b, w, bias) in params["inner"]:
        s1 = jnp.sum(h, axis=-1, keepdims=True)
        s2 = jnp.sum(h * h, axis=-1, keepdims=True)
        mean = s1 * inv_d
        var = jnp.maximum(s2 * inv_d - mean * mean, 0.0)
        h = (h - mean) * jax.lax.rsqrt(var + 1e-5) * g + b
        h = jnp.maximum(
            jnp.dot(h.astype(jnp.bfloat16), w.astype(jnp.bfloat16),
                    preferred_element_type=jnp.float32) + bias, 0.0)
    logits = jnp.dot(h.astype(jnp.bfloat16),
                     params["w_final"].astype(jnp.bfloat16),
                     preferred_element_type=jnp.float32) + params["b_final"]
    seq_len, batch = tokens_seq.shape
    return logits.reshape(seq_len, batch, -1)


if __name__ == "__main__":
    # Small shapes consistent with the module's forward pass.
    vocab_size = 128
    k = 3
    embed_size = 32
    num_inner_layers = 1
    seq_len = 8
    batch_size = 2

    key = jax.random.PRNGKey(0)
    key_params, key_tokens = jax.random.split(key)
    params = init_params(key_params, vocab_size, k, embed_size, num_inner_layers)
    tokens_seq = jax.random.randint(
        key_tokens, (seq_len, batch_size), 0, vocab_size, dtype=jnp.int32)

    out = kgram_mlp_forward_safe(tokens_seq, params, k=k)
    assert out.shape == (seq_len, batch_size, vocab_size), out.shape

    ref = jax.block_until_ready(reference_forward(tokens_seq, params, k=k))
    assert jnp.allclose(out, ref, atol=2e-2, rtol=2e-2), \
        float(jnp.max(jnp.abs(out - ref)))

    print("KERNEL_OK")
</pallas_src>

<mosaic_0001>
module attributes {stable_mosaic.version = 11 : i64} {
  func.func @_kgram_mlp_kernel(%arg0: i32, %arg1: i32, %arg2: memref<128x128xbf16, #tpu.memory_space<vmem>>, %arg3: memref<1x128xf32, #tpu.memory_space<vmem>>, %arg4: memref<1x128xf32, #tpu.memory_space<vmem>>, %arg5: memref<128x128xbf16, #tpu.memory_space<vmem>>, %arg6: memref<1x128xf32, #tpu.memory_space<vmem>>, %arg7: memref<128x128xbf16, #tpu.memory_space<vmem>>, %arg8: memref<1x128xf32, #tpu.memory_space<vmem>>, %arg9: memref<128x128xf32, #tpu.memory_space<vmem>>, %arg10: memref<128x128xbf16, #tpu.memory_space<vmem>>) attributes {dimension_semantics = [#tpu.dimension_semantics<parallel>, #tpu.dimension_semantics<arbitrary>], iteration_bounds = array<i64: 1, 1>, scalar_prefetch = 0 : i64, scratch_operands = 1 : i64, tpu.core_type = #tpu.core_type<tc>, window_params = [{transform_indices = @transform_0, window_bounds = array<i64: 128, 128>}, {pipeline_mode = #tpu.pipeline_mode<synchronous>, transform_indices = @transform_1, window_bounds = array<i64: 1, 128>}, {pipeline_mode = #tpu.pipeline_mode<synchronous>, transform_indices = @transform_2, window_bounds = array<i64: 1, 128>}, {pipeline_mode = #tpu.pipeline_mode<synchronous>, transform_indices = @transform_3, window_bounds = array<i64: 128, 128>}, {pipeline_mode = #tpu.pipeline_mode<synchronous>, transform_indices = @transform_4, window_bounds = array<i64: 1, 128>}, {transform_indices = @transform_5, window_bounds = array<i64: 128, 128>}, {transform_indices = @transform_6, window_bounds = array<i64: 1, 128>}, {transform_indices = @transform_7, window_bounds = array<i64: 128, 128>}]} {
    %c0_i32 = arith.constant 0 : i32
    %0 = arith.cmpi eq, %arg1, %c0_i32 : i32
    %1 = arith.extui %0 : i1 to i32
    %c0_i32_0 = arith.constant 0 : i32
    %2 = arith.cmpi ne, %1, %c0_i32_0 : i32
    scf.if %2 {
      %c0_8 = arith.constant 0 : index
      %c0_9 = arith.constant 0 : index
      %10 = vector.load %arg2[%c0_8, %c0_9] : memref<128x128xbf16, #tpu.memory_space<vmem>>, vector<128x128xbf16>
      %11 = arith.extf %10 : vector<128x128xbf16> to vector<128x128xf32>
      %cst_10 = arith.constant dense<0.000000e+00> : vector<128xf32>
      %12 = vector.multi_reduction <add>, %11, %cst_10 [1] : vector<128x128xf32> to vector<128xf32>
      %13 = vector.shape_cast %12 : vector<128xf32> to vector<128x1xf32>
      %14 = arith.mulf %11, %11 : vector<128x128xf32>
      %cst_11 = arith.constant dense<0.000000e+00> : vector<128xf32>
      %15 = vector.multi_reduction <add>, %14, %cst_11 [1] : vector<128x128xf32> to vector<128xf32>
      %16 = vector.shape_cast %15 : vector<128xf32> to vector<128x1xf32>
      %cst_12 = arith.constant 0.010416667 : f32
      %17 = vector.broadcast %cst_12 : f32 to vector<128x1xf32>
      %18 = arith.mulf %13, %17 : vector<128x1xf32>
      %cst_13 = arith.constant 0.010416667 : f32
      %19 = vector.broadcast %cst_13 : f32 to vector<128x1xf32>
      %20 = arith.mulf %16, %19 : vector<128x1xf32>
      %21 = arith.mulf %18, %18 : vector<128x1xf32>
      %22 = arith.subf %20, %21 : vector<128x1xf32>
      %cst_14 = arith.constant 0.000000e+00 : f32
      %23 = vector.broadcast %cst_14 : f32 to vector<128x1xf32>
      %24 = arith.maximumf %22, %23 : vector<128x1xf32>
      %25 = vector.broadcast %18 : vector<128x1xf32> to vector<128x128xf32>
      %26 = arith.subf %11, %25 : vector<128x128xf32>
      %cst_15 = arith.constant 9.99999974E-6 : f32
      %27 = vector.broadcast %cst_15 : f32 to vector<128x1xf32>
      %28 = arith.addf %24, %27 : vector<128x1xf32>
      %29 = math.rsqrt %28 : vector<128x1xf32>
      %30 = vector.broadcast %29 : vector<128x1xf32> to vector<128x128xf32>
      %31 = arith.mulf %26, %30 : vector<128x128xf32>
      %c0_16 = arith.constant 0 : index
      %c0_17 = arith.constant 0 : index
      %32 = vector.load %arg3[%c0_16, %c0_17] : memref<1x128xf32, #tpu.memory_space<vmem>>, vector<1x128xf32>
      %33 = vector.broadcast %32 : vector<1x128xf32> to vector<128x128xf32>
      %34 = arith.mulf %31, %33 : vector<128x128xf32>
      %c0_18 = arith.constant 0 : index
      %c0_19 = arith.constant 0 : index
      %35 = vector.load %arg4[%c0_18, %c0_19] : memref<1x128xf32, #tpu.memory_space<vmem>>, vector<1x128xf32>
      %36 = vector.broadcast %35 : vector<1x128xf32> to vector<128x128xf32>
      %37 = arith.addf %34, %36 : vector<128x128xf32>
      %38 = arith.truncf %37 : vector<128x128xf32> to vector<128x128xbf16>
      %c0_20 = arith.constant 0 : index
      %c0_21 = arith.constant 0 : index
      %39 = vector.load %arg5[%c0_20, %c0_21] : memref<128x128xbf16, #tpu.memory_space<vmem>>, vector<128x128xbf16>
      %cst_22 = arith.constant dense<0.000000e+00> : vector<128x128xf32>
      %40 = tpu.matmul %38, %39, %cst_22 {dimension_numbers = #tpu.dot_dimension_numbers<[1], [0], [0], [1], [0, 0, 1, 1], [], []>} : vector<128x128xbf16>, vector<128x128xbf16>, vector<128x128xf32> -> vector<128x128xf32>
      %c0_23 = arith.constant 0 : index
      %c0_24 = arith.constant 0 : index
      %41 = vector.load %arg6[%c0_23, %c0_24] : memref<1x128xf32, #tpu.memory_space<vmem>>, vector<1x128xf32>
      %42 = vector.broadcast %41 : vector<1x128xf32> to vector<128x128xf32>
      %43 = arith.addf %40, %42 : vector<128x128xf32>
      %cst_25 = arith.constant 0.000000e+00 : f32
      %44 = vector.broadcast %cst_25 : f32 to vector<128x128xf32>
      %45 = arith.maximumf %43, %44 : vector<128x128xf32>
      %46 = arith.truncf %45 : vector<128x128xf32> to vector<128x128xbf16>
      %c0_26 = arith.constant 0 : index
      %c0_27 = arith.constant 0 : index
      %47 = vector.load %arg10[%c0_26, %c0_27] : memref<128x128xbf16, #tpu.memory_space<vmem>>, vector<128x128xbf16>
      tpu.vector_store %arg10[%c0_26, %c0_27], %46 {strides = array<i32>} : memref<128x128xbf16, #tpu.memory_space<vmem>>, vector<128x128xbf16>,
    } else {
    }
    %c0 = arith.constant 0 : index
    %c0_1 = arith.constant 0 : index
    %3 = vector.load %arg10[%c0, %c0_1] : memref<128x128xbf16, #tpu.memory_space<vmem>>, vector<128x128xbf16>
    %c0_2 = arith.constant 0 : index
    %c0_3 = arith.constant 0 : index
    %4 = vector.load %arg7[%c0_2, %c0_3] : memref<128x128xbf16, #tpu.memory_space<vmem>>, vector<128x128xbf16>
    %cst = arith.constant dense<0.000000e+00> : vector<128x128xf32>
    %5 = tpu.matmul %3, %4, %cst {dimension_numbers = #tpu.dot_dimension_numbers<[1], [0], [0], [1], [0, 0, 1, 1], [], []>} : vector<128x128xbf16>, vector<128x128xbf16>, vector<128x128xf32> -> vector<128x128xf32>
    %c0_4 = arith.constant 0 : index
    %c0_5 = arith.constant 0 : index
    %6 = vector.load %arg8[%c0_4, %c0_5] : memref<1x128xf32, #tpu.memory_space<vmem>>, vector<1x128xf32>
    %7 = vector.broadcast %6 : vector<1x128xf32> to vector<128x128xf32>
    %8 = arith.addf %5, %7 : vector<128x128xf32>
    %c0_6 = arith.constant 0 : index
    %c0_7 = arith.constant 0 : index
    %9 = vector.load %arg9[%c0_6, %c0_7] : memref<128x128xf32, #tpu.memory_space<vmem>>, vector<128x128xf32>
    tpu.vector_store %arg9[%c0_6, %c0_7], %8 {strides = array<i32>} : memref<128x128xf32, #tpu.memory_space<vmem>>, vector<128x128xf32>,
    return
  }
  func.func @transform_0(%arg0: i32, %arg1: i32) -> (i32, i32) {
    %c0_i32 = arith.constant 0 : i32
    %c0_i32_0 = arith.constant 0 : i32
    return %arg0, %c0_i32 : i32, i32
  }
  func.func @transform_1(%arg0: i32, %arg1: i32) -> (i32, i32) {
    %c0_i32 = arith.constant 0 : i32
    %c0_i32_0 = arith.constant 0 : i32
    %c0_i32_1 = arith.constant 0 : i32
    return %c0_i32, %c0_i32_0 : i32, i32
  }
  func.func @transform_2(%arg0: i32, %arg1: i32) -> (i32, i32) {
    %c0_i32 = arith.constant 0 : i32
    %c0_i32_0 = arith.constant 0 : i32
    %c0_i32_1 = arith.constant 0 : i32
    return %c0_i32, %c0_i32_0 : i32, i32
  }
  func.func @transform_3(%arg0: i32, %arg1: i32) -> (i32, i32) {
    %c0_i32 = arith.constant 0 : i32
    %c0_i32_0 = arith.constant 0 : i32
    %c0_i32_1 = arith.constant 0 : i32
    return %c0_i32, %c0_i32_0 : i32, i32
  }
  func.func @transform_4(%arg0: i32, %arg1: i32) -> (i32, i32) {
    %c0_i32 = arith.constant 0 : i32
    %c0_i32_0 = arith.constant 0 : i32
    %c0_i32_1 = arith.constant 0 : i32
    return %c0_i32, %c0_i32_0 : i32, i32
  }
  func.func @transform_5(%arg0: i32, %arg1: i32) -> (i32, i32) {
    %c0_i32 = arith.constant 0 : i32
    %c0_i32_0 = arith.constant 0 : i32
    return %c0_i32, %arg1 : i32, i32
  }
  func.func @transform_6(%arg0: i32, %arg1: i32) -> (i32, i32) {
    %c0_i32 = arith.constant 0 : i32
    %c0_i32_0 = arith.constant 0 : i32
    return %c0_i32, %arg1 : i32, i32
  }
  func.func @transform_7(%arg0: i32, %arg1: i32) -> (i32, i32) {
    %c0_i32 = arith.constant 0 : i32
    return %arg0, %arg1 : i32, i32
  }
}

module attributes {stable_mosaic.version = 11 : i64} {
  func.func @_kgram_mlp_kernel(%arg0: i32, %arg1: i32, %arg2: memref<128x128xbf16, #tpu.memory_space<vmem>>, %arg3: memref<1x128xf32, #tpu.memory_space<vmem>>, %arg4: memref<1x128xf32, #tpu.memory_space<vmem>>, %arg5: memref<128x128xbf16, #tpu.memory_space<vmem>>, %arg6: memref<1x128xf32, #tpu.memory_space<vmem>>, %arg7: memref<128x128xbf16, #tpu.memory_space<vmem>>, %arg8: memref<1x128xf32, #tpu.memory_space<vmem>>, %arg9: memref<128x128xf32, #tpu.memory_space<vmem>>, %arg10: memref<128x128xbf16, #tpu.memory_space<vmem>>) attributes {dimension_semantics = [#tpu.dimension_semantics<parallel>, #tpu.dimension_semantics<arbitrary>], iteration_bounds = array<i64: 1, 1>, scalar_prefetch = 0 : i64, scratch_operands = 1 : i64, tpu.core_type = #tpu.core_type<tc>, window_params = [{transform_indices = @transform_0, window_bounds = array<i64: 128, 128>}, {pipeline_mode = #tpu.pipeline_mode<synchronous>, transform_indices = @transform_1, window_bounds = array<i64: 1, 128>}, {pipeline_mode = #tpu.pipeline_mode<synchronous>, transform_indices = @transform_2, window_bounds = array<i64: 1, 128>}, {pipeline_mode = #tpu.pipeline_mode<synchronous>, transform_indices = @transform_3, window_bounds = array<i64: 128, 128>}, {pipeline_mode = #tpu.pipeline_mode<synchronous>, transform_indices = @transform_4, window_bounds = array<i64: 1, 128>}, {transform_indices = @transform_5, window_bounds = array<i64: 128, 128>}, {transform_indices = @transform_6, window_bounds = array<i64: 1, 128>}, {transform_indices = @transform_7, window_bounds = array<i64: 128, 128>}]} {
    %c0_i32 = arith.constant 0 : i32
    %0 = arith.cmpi eq, %arg1, %c0_i32 : i32
    %1 = arith.extui %0 : i1 to i32
    %c0_i32_0 = arith.constant 0 : i32
    %2 = arith.cmpi ne, %1, %c0_i32_0 : i32
    scf.if %2 {
      %c0_8 = arith.constant 0 : index
      %c0_9 = arith.constant 0 : index
      %10 = vector.load %arg2[%c0_8, %c0_9] : memref<128x128xbf16, #tpu.memory_space<vmem>>, vector<128x128xbf16>
      %11 = arith.extf %10 : vector<128x128xbf16> to vector<128x128xf32>
      %cst_10 = arith.constant dense<0.000000e+00> : vector<128xf32>
      %12 = vector.multi_reduction <add>, %11, %cst_10 [1] : vector<128x128xf32> to vector<128xf32>
      %13 = vector.shape_cast %12 : vector<128xf32> to vector<128x1xf32>
      %14 = arith.mulf %11, %11 : vector<128x128xf32>
      %cst_11 = arith.constant dense<0.000000e+00> : vector<128xf32>
      %15 = vector.multi_reduction <add>, %14, %cst_11 [1] : vector<128x128xf32> to vector<128xf32>
      %16 = vector.shape_cast %15 : vector<128xf32> to vector<128x1xf32>
      %cst_12 = arith.constant 0.010416667 : f32
      %17 = vector.broadcast %cst_12 : f32 to vector<128x1xf32>
      %18 = arith.mulf %13, %17 : vector<128x1xf32>
      %cst_13 = arith.constant 0.010416667 : f32
      %19 = vector.broadcast %cst_13 : f32 to vector<128x1xf32>
      %20 = arith.mulf %16, %19 : vector<128x1xf32>
      %21 = arith.mulf %18, %18 : vector<128x1xf32>
      %22 = arith.subf %20, %21 : vector<128x1xf32>
      %cst_14 = arith.constant 0.000000e+00 : f32
      %23 = vector.broadcast %cst_14 : f32 to vector<128x1xf32>
      %24 = arith.maximumf %22, %23 : vector<128x1xf32>
      %25 = vector.broadcast %18 : vector<128x1xf32> to vector<128x128xf32>
      %26 = arith.subf %11, %25 : vector<128x128xf32>
      %cst_15 = arith.constant 9.99999974E-6 : f32
      %27 = vector.broadcast %cst_15 : f32 to vector<128x1xf32>
      %28 = arith.addf %24, %27 : vector<128x1xf32>
      %29 = math.rsqrt %28 : vector<128x1xf32>
      %30 = vector.broadcast %29 : vector<128x1xf32> to vector<128x128xf32>
      %31 = arith.mulf %26, %30 : vector<128x128xf32>
      %c0_16 = arith.constant 0 : index
      %c0_17 = arith.constant 0 : index
      %32 = vector.load %arg3[%c0_16, %c0_17] : memref<1x128xf32, #tpu.memory_space<vmem>>, vector<1x128xf32>
      %33 = vector.broadcast %32 : vector<1x128xf32> to vector<128x128xf32>
      %34 = arith.mulf %31, %33 : vector<128x128xf32>
      %c0_18 = arith.constant 0 : index
      %c0_19 = arith.constant 0 : index
      %35 = vector.load %arg4[%c0_18, %c0_19] : memref<1x128xf32, #tpu.memory_space<vmem>>, vector<1x128xf32>
      %36 = vector.broadcast %35 : vector<1x128xf32> to vector<128x128xf32>
      %37 = arith.addf %34, %36 : vector<128x128xf32>
      %38 = arith.truncf %37 : vector<128x128xf32> to vector<128x128xbf16>
      %c0_20 = arith.constant 0 : index
      %c0_21 = arith.constant 0 : index
      %39 = vector.load %arg5[%c0_20, %c0_21] : memref<128x128xbf16, #tpu.memory_space<vmem>>, vector<128x128xbf16>
      %cst_22 = arith.constant dense<0.000000e+00> : vector<128x128xf32>
      %40 = tpu.matmul %38, %39, %cst_22 {dimension_numbers = #tpu.dot_dimension_numbers<[1], [0], [0], [1], [0, 0, 1, 1], [], []>} : vector<128x128xbf16>, vector<128x128xbf16>, vector<128x128xf32> -> vector<128x128xf32>
      %c0_23 = arith.constant 0 : index
      %c0_24 = arith.constant 0 : index
      %41 = vector.load %arg6[%c0_23, %c0_24] : memref<1x128xf32, #tpu.memory_space<vmem>>, vector<1x128xf32>
      %42 = vector.broadcast %41 : vector<1x128xf32> to vector<128x128xf32>
      %43 = arith.addf %40, %42 : vector<128x128xf32>
      %cst_25 = arith.constant 0.000000e+00 : f32
      %44 = vector.broadcast %cst_25 : f32 to vector<128x128xf32>
      %45 = arith.maximumf %43, %44 : vector<128x128xf32>
      %46 = arith.truncf %45 : vector<128x128xf32> to vector<128x128xbf16>
      %c0_26 = arith.constant 0 : index
      %c0_27 = arith.constant 0 : index
      %47 = vector.load %arg10[%c0_26, %c0_27] : memref<128x128xbf16, #tpu.memory_space<vmem>>, vector<128x128xbf16>
      tpu.vector_store %arg10[%c0_26, %c0_27], %46 {strides = array<i32>} : memref<128x128xbf16, #tpu.memory_space<vmem>>, vector<128x128xbf16>,
    } else {
    }
    %c0 = arith.constant 0 : index
    %c0_1 = arith.constant 0 : index
    %3 = vector.load %arg10[%c0, %c0_1] : memref<128x128xbf16, #tpu.memory_space<vmem>>, vector<128x128xbf16>
    %c0_2 = arith.constant 0 : index
    %c0_3 = arith.constant 0 : index
    %4 = vector.load %arg7[%c0_2, %c0_3] : memref<128x128xbf16, #tpu.memory_space<vmem>>, vector<128x128xbf16>
    %cst = arith.constant dense<0.000000e+00> : vector<128x128xf32>
    %5 = tpu.matmul %3, %4, %cst {dimension_numbers = #tpu.dot_dimension_numbers<[1], [0], [0], [1], [0, 0, 1, 1], [], []>} : vector<128x128xbf16>, vector<128x128xbf16>, vector<128x128xf32> -> vector<128x128xf32>
    %c0_4 = arith.constant 0 : index
    %c0_5 = arith.constant 0 : index
    %6 = vector.load %arg8[%c0_4, %c0_5] : memref<1x128xf32, #tpu.memory_space<vmem>>, vector<1x128xf32>
    %7 = vector.broadcast %6 : vector<1x128xf32> to vector<128x128xf32>
    %8 = arith.addf %5, %7 : vector<128x128xf32>
    %c0_6 = arith.constant 0 : index
    %c0_7 = arith.constant 0 : index
    %9 = vector.load %arg9[%c0_6, %c0_7] : memref<128x128xf32, #tpu.memory_space<vmem>>, vector<128x128xf32>
    tpu.vector_store %arg9[%c0_6, %c0_7], %8 {strides = array<i32>} : memref<128x128xf32, #tpu.memory_space<vmem>>, vector<128x128xf32>,
    return
  }
  func.func @transform_0(%arg0: i32, %arg1: i32) -> (i32, i32) {
    %c0_i32 = arith.constant 0 : i32
    %c0_i32_0 = arith.constant 0 : i32
    return %arg0, %c0_i32 : i32, i32
  }
  func.func @transform_1(%arg0: i32, %arg1: i32) -> (i32, i32) {
    %c0_i32 = arith.constant 0 : i32
    %c0_i32_0 = arith.constant 0 : i32
    %c0_i32_1 = arith.constant 0 : i32
    return %c0_i32, %c0_i32_0 : i32, i32
  }
  func.func @transform_2(%arg0: i32, %arg1: i32) -> (i32, i32) {
    %c0_i32 = arith.constant 0 : i32
    %c0_i32_0 = arith.constant 0 : i32
    %c0_i32_1 = arith.constant 0 : i32
    return %c0_i32, %c0_i32_0 : i32, i32
  }
  func.func @transform_3(%arg0: i32, %arg1: i32) -> (i32, i32) {
    %c0_i32 = arith.constant 0 : i32
    %c0_i32_0 = arith.constant 0 : i32
    %c0_i32_1 = arith.constant 0 : i32
    return %c0_i32, %c0_i32_0 : i32, i32
  }
  func.func @transform_4(%arg0: i32, %arg1: i32) -> (i32, i32) {
    %c0_i32 = arith.constant 0 : i32
    %c0_i32_0 = arith.constant 0 : i32
    %c0_i32_1 = arith.constant 0 : i32
    return %c0_i32, %c0_i32_0 : i32, i32
  }
  func.func @transform_5(%arg0: i32, %arg1: i32) -> (i32, i32) {
    %c0_i32 = arith.constant 0 : i32
    %c0_i32_0 = arith.constant 0 : i32
    return %c0_i32, %arg1 : i32, i32
  }
  func.func @transform_6(%arg0: i32, %arg1: i32) -> (i32, i32) {
    %c0_i32 = arith.constant 0 : i32
    %c0_i32_0 = arith.constant 0 : i32
    return %c0_i32, %arg1 : i32, i32
  }
  func.func @transform_7(%arg0: i32, %arg1: i32) -> (i32, i32) {
    %c0_i32 = arith.constant 0 : i32
    return %arg0, %arg1 : i32, i32
  }
}

</mosaic_0001>

<llo_original>
// kernel: tpu_custom_call.1
$region0: #{tpu_custom_call.1}
  #allocation0 [shape = 'u32[]', space=smem, size = 0x4, offset = 0x4, fixed_abs, tag = 'smem constant byte address 0x4 - core index']
  #allocation1 [shape = 'u32[72,128]{1,0:T(1,128)}', space=vmem, size = 0x9000, scoped, tag = 'internal scratch']
  #allocation2 [shape = 'bf16[128,128]{1,0:T(8,128)(2,1)}', space=vmem, size = 0x8000, scoped, tag = 'scratch operand']
  %s0 = inlined_call_operand.hbm [shape: bf16[128,128], index: 0, kind: input, shape index: {}]
  %s1 = inlined_call_operand.hbm [shape: f32[1,128], index: 1, kind: input, shape index: {}]
  %s2 = inlined_call_operand.vmem [shape: f32[1,128], index: 2, kind: input, shape index: {}]
  %s3 = inlined_call_operand.hbm [shape: bf16[128,128], index: 3, kind: input, shape index: {}]
  %s4 = inlined_call_operand.vmem [shape: f32[1,128], index: 4, kind: input, shape index: {}]
  %s5 = inlined_call_operand.hbm [shape: bf16[128,128], index: 5, kind: input, shape index: {}]
  %s6 = inlined_call_operand.vmem [shape: f32[1,128], index: 6, kind: input, shape index: {}]
  %s7 = inlined_call_operand.hbm [shape: f32[128,128], index: 7, kind: output, shape index: {}]
  %s8 = sld [smem:[#allocation0]]
  $region58: #{tpu_custom_call.1} parent=0
    _
  %s10 = ssub.s32 1, %s8
  %s11 = scalar_select 0, %s10, %s8
  $region1: #{tpu_custom_call.1} parent=0
    #allocation3 [shape = 'u8[32768]{0}', space=vmem, size = 0x8000, scoped, tag = 'input window, operand 0, single buffered']
    #allocation4 [shape = 's32[1]{0}', space=sflag, size = 0x4, scoped, tag = 'scoped memory for tpu_custom_call.1']
    #allocation5 [shape = 's32[1]{0}', space=sflag, size = 0x4, scoped, tag = 'scoped memory for tpu_custom_call.1']
    #allocation6 [shape = 'u8[512]{0}', space=vmem, size = 0x400, scoped, tag = 'input window, operand 1, single buffered']
    #allocation7 [shape = 's32[1]{0}', space=sflag, size = 0x4, scoped, tag = 'scoped memory for tpu_custom_call.1']
    #allocation8 [shape = 'u8[32768]{0}', space=vmem, size = 0x8000, scoped, tag = 'input window, operand 3, single buffered']
    #allocation9 [shape = 'u8[32768]{0}', space=vmem, size = 0x8000, scoped, tag = 'input window, operand 5, single buffered']
    #allocation10 [shape = 's32[1]{0}', space=sflag, size = 0x4, scoped, tag = 'scoped memory for tpu_custom_call.1']
    #allocation11 [shape = 'u8[65536]{0}', space=vmem, size = 0x10000, scoped, tag = 'output window, operand 0, single buffered']
    %12 = vsyncpa [#allocation4], 0
    %13 = vsyncpa [#allocation7], 0
    %14 = vsyncpa [#allocation10], 0
    %15 = vsyncpa [#allocation5], 0
    // Predicated region
    $region2: #{tpu_custom_call.1} parent=1 // pred_check
      _
    $region3: #{tpu_custom_call.1} parent=1 // pred_check_branch
      %17 = sbr.rel (0) target = $region5
    $region4: #{tpu_custom_call.1} parent=1 // pred_region
      %19 = vsyncadd [#allocation4], 0
      %s20 = sshll.u32 %s0, 4
      %s21 = int_to_ptr.hbm [resolvable:$true] %s20
      %s22 = sshll.u32 [#allocation3], 4
      %s23 = int_to_ptr.vmem [resolvable:$true] %s22
      %28 = dma.hbm_to_vmem [thread:$0]  %s21, 1024, %s23, [#allocation4], 64, 64, 4
    $region5: #{tpu_custom_call.1} parent=1 // pred_fallthru
      _
    // Predicated region
    $region6: #{tpu_custom_call.1} parent=1 // pred_check
      _
    $region7: #{tpu_custom_call.1} parent=1 // pred_check_branch
      %30 = sbr.rel (0) target = $region9
    $region8: #{tpu_custom_call.1} parent=1 // pred_region
      %32 = vsyncadd [#allocation7], 0
      %s34 = sshll.u32 %s1, 4
      %s35 = int_to_ptr.hbm [resolvable:$true] %s34
      %s36 = sshll.u32 [#allocation6], 4
      %s37 = int_to_ptr.vmem [resolvable:$true] %s36
      %39 = dma.hbm_to_vmem [thread:$0]  %s35, 16, %s37, [#allocation7]
    $region9: #{tpu_custom_call.1} parent=1 // pred_fallthru
      _
    // Predicated region
    $region10: #{tpu_custom_call.1} parent=1 // pred_check
      _
    $region11: #{tpu_custom_call.1} parent=1 // pred_check_branch
      %41 = sbr.rel (0) target = $region13
    $region12: #{tpu_custom_call.1} parent=1 // pred_region
      _
    $region13: #{tpu_custom_call.1} parent=1 // pred_fallthru
      _
    // Predicated region
    $region14: #{tpu_custom_call.1} parent=1 // pred_check
      _
    $region15: #{tpu_custom_call.1} parent=1 // pred_check_branch
      %43 = sbr.rel (0) target = $region17
    $region16: #{tpu_custom_call.1} parent=1 // pred_region
      %45 = vsyncadd [#allocation7], 0
      %s46 = sshll.u32 %s3, 4
      %s47 = int_to_ptr.hbm [resolvable:$true] %s46
      %s48 = sshll.u32 [#allocation8], 4
      %s49 = int_to_ptr.vmem [resolvable:$true] %s48
      %54 = dma.hbm_to_vmem [thread:$0]  %s47, 1024, %s49, [#allocation7], 64, 64, 4
    $region17: #{tpu_custom_call.1} parent=1 // pred_fallthru
      _
    // Predicated region
    $region18: #{tpu_custom_call.1} parent=1 // pred_check
      _
    $region19: #{tpu_custom_call.1} parent=1 // pred_check_branch
      %56 = sbr.rel (0) target = $region21
    $region20: #{tpu_custom_call.1} parent=1 // pred_region
      _
    $region21: #{tpu_custom_call.1} parent=1 // pred_fallthru
      _
    // Predicated region
    $region22: #{tpu_custom_call.1} parent=1 // pred_check
      _
    $region23: #{tpu_custom_call.1} parent=1 // pred_check_branch
      %58 = sbr.rel (0) target = $region25
    $region24: #{tpu_custom_call.1} parent=1 // pred_region
      %60 = vsyncadd [#allocation10], 0
      %s61 = sshll.u32 %s5, 4
      %s62 = int_to_ptr.hbm [resolvable:$true] %s61
      %s63 = sshll.u32 [#allocation9], 4
      %s64 = int_to_ptr.vmem [resolvable:$true] %s63
      %69 = dma.hbm_to_vmem [thread:$0]  %s62, 1024, %s64, [#allocation10], 64, 64, 4
    $region25: #{tpu_custom_call.1} parent=1 // pred_fallthru
      _
    // Predicated region
    $region26: #{tpu_custom_call.1} parent=1 // pred_check
      _
    $region27: #{tpu_custom_call.1} parent=1 // pred_check_branch
      %71 = sbr.rel (0) target = $region29
    $region28: #{tpu_custom_call.1} parent=1 // pred_region
      _
    $region29: #{tpu_custom_call.1} parent=1 // pred_fallthru
      _
    // Predicated region
    $region30: #{tpu_custom_call.1} parent=1 // pred_check
      _
    $region31: #{tpu_custom_call.1} parent=1 // pred_check_branch
      %73 = sbr.rel (0) target = $region33
    $region32: #{tpu_custom_call.1} parent=1 // pred_region
      %75 = dma.done [#allocation4], 1024
    $region33: #{tpu_custom_call.1} parent=1 // pred_fallthru
      _
    // Predicated region
    $region34: #{tpu_custom_call.1} parent=1 // pred_check
      _
    $region35: #{tpu_custom_call.1} parent=1 // pred_check_branch
      %77 = sbr.rel (0) target = $region37
    $region36: #{tpu_custom_call.1} parent=1 // pred_region
      %79 = dma.done [#allocation7], 16
    $region37: #{tpu_custom_call.1} parent=1 // pred_fallthru
      _
    // Predicated region
    $region38: #{tpu_custom_call.1} parent=1 // pred_check
      _
    $region39: #{tpu_custom_call.1} parent=1 // pred_check_branch
      %81 = sbr.rel (0) target = $region41
    $region40: #{tpu_custom_call.1} parent=1 // pred_region
      %83 = dma.done [#allocation7], 1024
    $region41: #{tpu_custom_call.1} parent=1 // pred_fallthru
      _
    // Predicated region
    $region42: #{tpu_custom_call.1} parent=1 // pred_check
      _
    $region43: #{tpu_custom_call.1} parent=1 // pred_check_branch
      %85 = sbr.rel (0) target = $region45
    $region44: #{tpu_custom_call.1} parent=1 // pred_region
      %87 = dma.done [#allocation10], 1024
    $region45: #{tpu_custom_call.1} parent=1 // pred_fallthru
      _
    %p88 = scmp.eq.s32.totalorder 0, 0
    // Predicated region
    $region46: #{tpu_custom_call.1} parent=1 // pred_check
      %p89 = pneg %p88
    $region47: #{tpu_custom_call.1} parent=1 // pred_check_branch
      %91 = sbr.rel (%p89) target = $region49
    $region48: #{tpu_custom_call.1} parent=1 // pred_region
      %v92 = vld [vmem:[#allocation3] sm:$0xf]
      %v93 = vld [vmem:[#allocation3 + $0x4] sm:$0xf]
      %v94 = vld [vmem:[#allocation3 + $0x8] sm:$0xf]
      %v95 = vld [vmem:[#allocation3 + $0xc] sm:$0xf]
      %v96 = vld [vmem:[#allocation3 + $0x10] sm:$0xf]
      %v97 = vld [vmem:[#allocation3 + $0x14] sm:$0xf]
      %v98 = vld [vmem:[#allocation3 + $0x18] sm:$0xf]
      %v99 = vld [vmem:[#allocation3 + $0x1c] sm:$0xf]
      %v100 = vld [vmem:[#allocation3 + $0x20] sm:$0xf]
      %v101 = vld [vmem:[#allocation3 + $0x24] sm:$0xf]
      %v102 = vld [vmem:[#allocation3 + $0x28] sm:$0xf]
      %v103 = vld [vmem:[#allocation3 + $0x2c] sm:$0xf]
      %v104 = vld [vmem:[#allocation3 + $0x30] sm:$0xf]
      %v105 = vld [vmem:[#allocation3 + $0x34] sm:$0xf]
      %v106 = vld [vmem:[#allocation3 + $0x38] sm:$0xf]
      %v107 = vld [vmem:[#allocation3 + $0x3c] sm:$0xf]
      %v108 = vunpack.c.l.bf16 %v92
      %v109 = vunpack.c.l.bf16 %v93
      %v110 = vunpack.c.l.bf16 %v94
      %v111 = vunpack.c.l.bf16 %v95
      %v112 = vunpack.c.l.bf16 %v96
      %v113 = vunpack.c.l.bf16 %v97
      %v114 = vunpack.c.l.bf16 %v98
      %v115 = vunpack.c.l.bf16 %v99
      %v116 = vunpack.c.l.bf16 %v100
      %v117 = vunpack.c.l.bf16 %v101
      %v118 = vunpack.c.l.bf16 %v102
      %v119 = vunpack.c.l.bf16 %v103
      %v120 = vunpack.c.l.bf16 %v104
      %v121 = vunpack.c.l.bf16 %v105
      %v122 = vunpack.c.l.bf16 %v106
      %v123 = vunpack.c.l.bf16 %v107
      %124 = vadd.xlane.f32.xlu0 %v108
      %v125 = vpop.xlane.xlu0 %124
      %126 = vadd.xlane.f32.xlu0 %v109
      %v127 = vpop.xlane.xlu0 %126
      %128 = vadd.xlane.f32.xlu0 %v110
      %v129 = vpop.xlane.xlu0 %128
      %130 = vadd.xlane.f32.xlu0 %v111
      %v131 = vpop.xlane.xlu0 %130
      %132 = vadd.xlane.f32.xlu0 %v112
      %v133 = vpop.xlane.xlu0 %132
      %134 = vadd.xlane.f32.xlu0 %v113
      %v135 = vpop.xlane.xlu0 %134
      %136 = vadd.xlane.f32.xlu0 %v114
      %v137 = vpop.xlane.xlu0 %136
      %138 = vadd.xlane.f32.xlu0 %v115
      %v139 = vpop.xlane.xlu0 %138
      %140 = vadd.xlane.f32.xlu0 %v116
      %v141 = vpop.xlane.xlu0 %140
      %142 = vadd.xlane.f32.xlu0 %v117
      %v143 = vpop.xlane.xlu0 %142
      %144 = vadd.xlane.f32.xlu0 %v118
      %v145 = vpop.xlane.xlu0 %144
      %146 = vadd.xlane.f32.xlu0 %v119
      %v147 = vpop.xlane.xlu0 %146
      %148 = vadd.xlane.f32.xlu0 %v120
      %v149 = vpop.xlane.xlu0 %148
      %150 = vadd.xlane.f32.xlu0 %v121
      %v151 = vpop.xlane.xlu0 %150
      %152 = vadd.xlane.f32.xlu0 %v122
      %v153 = vpop.xlane.xlu0 %152
      %154 = vadd.xlane.f32.xlu0 %v123
      %v155 = vpop.xlane.xlu0 %154
      %v156 = vmul.f32 %v108, %v108
      %v157 = vmul.f32 %v109, %v109
      %v158 = vmul.f32 %v110, %v110
      %v159 = vmul.f32 %v111, %v111
      %v160 = vmul.f32 %v112, %v112
      %v161 = vmul.f32 %v113, %v113
      %v162 = vmul.f32 %v114, %v114
      %v163 = vmul.f32 %v115, %v115
      %v164 = vmul.f32 %v116, %v116
      %v165 = vmul.f32 %v117, %v117
      %v166 = vmul.f32 %v118, %v118
      %v167 = vmul.f32 %v119, %v119
      %v168 = vmul.f32 %v120, %v120
      %v169 = vmul.f32 %v121, %v121
      %v170 = vmul.f32 %v122, %v122
      %v171 = vmul.f32 %v123, %v123
      %172 = vadd.xlane.f32.xlu0 %v156
      %v173 = vpop.xlane.xlu0 %172
      %174 = vadd.xlane.f32.xlu0 %v157
      %v175 = vpop.xlane.xlu0 %174
      %176 = vadd.xlane.f32.xlu0 %v158
      %v177 = vpop.xlane.xlu0 %176
      %178 = vadd.xlane.f32.xlu0 %v159
      %v179 = vpop.xlane.xlu0 %178
      %180 = vadd.xlane.f32.xlu0 %v160
      %v181 = vpop.xlane.xlu0 %180
      %182 = vadd.xlane.f32.xlu0 %v161
      %v183 = vpop.xlane.xlu0 %182
      %184 = vadd.xlane.f32.xlu0 %v162
      %v185 = vpop.xlane.xlu0 %184
      %186 = vadd.xlane.f32.xlu0 %v163
      %v187 = vpop.xlane.xlu0 %186
      %188 = vadd.xlane.f32.xlu0 %v164
      %v189 = vpop.xlane.xlu0 %188
      %190 = vadd.xlane.f32.xlu0 %v165
      %v191 = vpop.xlane.xlu0 %190
      %192 = vadd.xlane.f32.xlu0 %v166
      %v193 = vpop.xlane.xlu0 %192
      %194 = vadd.xlane.f32.xlu0 %v167
      %v195 = vpop.xlane.xlu0 %194
      %196 = vadd.xlane.f32.xlu0 %v168
      %v197 = vpop.xlane.xlu0 %196
      %198 = vadd.xlane.f32.xlu0 %v169
      %v199 = vpop.xlane.xlu0 %198
      %200 = vadd.xlane.f32.xlu0 %v170
      %v201 = vpop.xlane.xlu0 %200
      %202 = vadd.xlane.f32.xlu0 %v171
      %v203 = vpop.xlane.xlu0 %202
      %v204 = vmul.f32 %v125, 0.010416667
      %v205 = vmul.f32 %v127, 0.010416667
      %v206 = vmul.f32 %v129, 0.010416667
      %v207 = vmul.f32 %v131, 0.010416667
      %v208 = vmul.f32 %v133, 0.010416667
      %v209 = vmul.f32 %v135, 0.010416667
      %v210 = vmul.f32 %v137, 0.010416667
      %v211 = vmul.f32 %v139, 0.010416667
      %v212 = vmul.f32 %v141, 0.010416667
      %v213 = vmul.f32 %v143, 0.010416667
      %v214 = vmul.f32 %v145, 0.010416667
      %v215 = vmul.f32 %v147, 0.010416667
      %v216 = vmul.f32 %v149, 0.010416667
      %v217 = vmul.f32 %v151, 0.010416667
      %v218 = vmul.f32 %v153, 0.010416667
      %v219 = vmul.f32 %v155, 0.010416667
      %v220 = vmul.f32 %v173, 0.010416667
      %v221 = vmul.f32 %v175, 0.010416667
      %v222 = vmul.f32 %v177, 0.010416667
      %v223 = vmul.f32 %v179, 0.010416667
      %v224 = vmul.f32 %v181, 0.010416667
      %v225 = vmul.f32 %v183, 0.010416667
      %v226 = vmul.f32 %v185, 0.010416667
      %v227 = vmul.f32 %v187, 0.010416667
      %v228 = vmul.f32 %v189, 0.010416667
      %v229 = vmul.f32 %v191, 0.010416667
      %v230 = vmul.f32 %v193, 0.010416667
      %v231 = vmul.f32 %v195, 0.010416667
      %v232 = vmul.f32 %v197, 0.010416667
      %v233 = vmul.f32 %v199, 0.010416667
      %v234 = vmul.f32 %v201, 0.010416667
      %v235 = vmul.f32 %v203, 0.010416667
      %v236 = vmul.f32 %v204, %v204
      %v237 = vmul.f32 %v205, %v205
      %v238 = vmul.f32 %v206, %v206
      %v239 = vmul.f32 %v207, %v207
      %v240 = vmul.f32 %v208, %v208
      %v241 = vmul.f32 %v209, %v209
      %v242 = vmul.f32 %v210, %v210
      %v243 = vmul.f32 %v211, %v211
      %v244 = vmul.f32 %v212, %v212
      %v245 = vmul.f32 %v213, %v213
      %v246 = vmul.f32 %v214, %v214
      %v247 = vmul.f32 %v215, %v215
      %v248 = vmul.f32 %v216, %v216
      %v249 = vmul.f32 %v217, %v217
      %v250 = vmul.f32 %v218, %v218
      %v251 = vmul.f32 %v219, %v219
      %v252 = vsub.f32 %v220, %v236
      %v253 = vsub.f32 %v221, %v237
      %v254 = vsub.f32 %v222, %v238
      %v255 = vsub.f32 %v223, %v239
      %v256 = vsub.f32 %v224, %v240
      %v257 = vsub.f32 %v225, %v241
      %v258 = vsub.f32 %v226, %v242
      %v259 = vsub.f32 %v227, %v243
      %v260 = vsub.f32 %v228, %v244
      %v261 = vsub.f32 %v229, %v245
      %v262 = vsub.f32 %v230, %v246
      %v263 = vsub.f32 %v231, %v247
      %v264 = vsub.f32 %v232, %v248
      %v265 = vsub.f32 %v233, %v249
      %v266 = vsub.f32 %v234, %v250
      %v267 = vsub.f32 %v235, %v251
      %v268 = vmax.f32 %v252, 0.0
      %v269 = vmax.f32 %v253, 0.0
      %v270 = vmax.f32 %v254, 0.0
      %v271 = vmax.f32 %v255, 0.0
      %v272 = vmax.f32 %v256, 0.0
      %v273 = vmax.f32 %v257, 0.0
      %v274 = vmax.f32 %v258, 0.0
      %v275 = vmax.f32 %v259, 0.0
      %v276 = vmax.f32 %v260, 0.0
      %v277 = vmax.f32 %v261, 0.0
      %v278 = vmax.f32 %v262, 0.0
      %v279 = vmax.f32 %v263, 0.0
      %v280 = vmax.f32 %v264, 0.0
      %v281 = vmax.f32 %v265, 0.0
      %v282 = vmax.f32 %v266, 0.0
      %v283 = vmax.f32 %v267, 0.0
      %v284 = vsub.f32 %v108, %v204
      %v285 = vsub.f32 %v109, %v205
      %v286 = vsub.f32 %v110, %v206
      %v287 = vsub.f32 %v111, %v207
      %v288 = vsub.f32 %v112, %v208
      %v289 = vsub.f32 %v113, %v209
      %v290 = vsub.f32 %v114, %v210
      %v291 = vsub.f32 %v115, %v211
      %v292 = vsub.f32 %v116, %v212
      %v293 = vsub.f32 %v117, %v213
      %v294 = vsub.f32 %v118, %v214
      %v295 = vsub.f32 %v119, %v215
      %v296 = vsub.f32 %v120, %v216
      %v297 = vsub.f32 %v121, %v217
      %v298 = vsub.f32 %v122, %v218
      %v299 = vsub.f32 %v123, %v219
      %v300 = vadd.f32 %v268, 1e-05
      %v301 = vadd.f32 %v269, 1e-05
      %v302 = vadd.f32 %v270, 1e-05
      %v303 = vadd.f32 %v271, 1e-05
      %v304 = vadd.f32 %v272, 1e-05
      %v305 = vadd.f32 %v273, 1e-05
      %v306 = vadd.f32 %v274, 1e-05
      %v307 = vadd.f32 %v275, 1e-05
      %v308 = vadd.f32 %v276, 1e-05
      %v309 = vadd.f32 %v277, 1e-05
      %v310 = vadd.f32 %v278, 1e-05
      %v311 = vadd.f32 %v279, 1e-05
      %v312 = vadd.f32 %v280, 1e-05
      %v313 = vadd.f32 %v281, 1e-05
      %v314 = vadd.f32 %v282, 1e-05
      %v315 = vadd.f32 %v283, 1e-05
      %v316 = vrsqrt.pop %v300
      %v317 = vmul.f32 %v316, %v300
      %v318 = vmul.f32 %v317, %v316
      %v319 = vmul.f32 0.5, %v318
      %v320 = vsub.f32 1.5, %v319
      %v321 = vmul.f32 %v316, %v320
      %vm322 = vweird.f32 %v300
      %vm323 = vweird.f32 %v316
      %vm324 = vmor %vm322, %vm323
      %v325 = vsel %vm324, %v316, %v321
      %v326 = vrsqrt.pop %v301
      %v327 = vmul.f32 %v326, %v301
      %v328 = vmul.f32 %v327, %v326
      %v329 = vmul.f32 0.5, %v328
      %v330 = vsub.f32 1.5, %v329
      %v331 = vmul.f32 %v326, %v330
      %vm332 = vweird.f32 %v301
      %vm333 = vweird.f32 %v326
      %vm334 = vmor %vm332, %vm333
      %v335 = vsel %vm334, %v326, %v331
      %v336 = vrsqrt.pop %v302
      %v337 = vmul.f32 %v336, %v302
      %v338 = vmul.f32 %v337, %v336
      %v339 = vmul.f32 0.5, %v338
      %v340 = vsub.f32 1.5, %v339
      %v341 = vmul.f32 %v336, %v340
      %vm342 = vweird.f32 %v302
      %vm343 = vweird.f32 %v336
      %vm344 = vmor %vm342, %vm343
      %v345 = vsel %vm344, %v336, %v341
      %v346 = vrsqrt.pop %v303
      %v347 = vmul.f32 %v346, %v303
      %v348 = vmul.f32 %v347, %v346
      %v349 = vmul.f32 0.5, %v348
      %v350 = vsub.f32 1.5, %v349
      %v351 = vmul.f32 %v346, %v350
      %vm352 = vweird.f32 %v303
      %vm353 = vweird.f32 %v346
      %vm354 = vmor %vm352, %vm353
      %v355 = vsel %vm354, %v346, %v351
      %v356 = vrsqrt.pop %v304
      %v357 = vmul.f32 %v356, %v304
      %v358 = vmul.f32 %v357, %v356
      %v359 = vmul.f32 0.5, %v358
      %v360 = vsub.f32 1.5, %v359
      %v361 = vmul.f32 %v356, %v360
      %vm362 = vweird.f32 %v304
      %vm363 = vweird.f32 %v356
      %vm364 = vmor %vm362, %vm363
      %v365 = vsel %vm364, %v356, %v361
      %v366 = vrsqrt.pop %v305
      %v367 = vmul.f32 %v366, %v305
      %v368 = vmul.f32 %v367, %v366
      %v369 = vmul.f32 0.5, %v368
      %v370 = vsub.f32 1.5, %v369
      %v371 = vmul.f32 %v366, %v370
      %vm372 = vweird.f32 %v305
      %vm373 = vweird.f32 %v366
      %vm374 = vmor %vm372, %vm373
      %v375 = vsel %vm374, %v366, %v371
      %v376 = vrsqrt.pop %v306
      %v377 = vmul.f32 %v376, %v306
      %v378 = vmul.f32 %v377, %v376
      %v379 = vmul.f32 0.5, %v378
      %v380 = vsub.f32 1.5, %v379
      %v381 = vmul.f32 %v376, %v380
      %vm382 = vweird.f32 %v306
      %vm383 = vweird.f32 %v376
      %vm384 = vmor %vm382, %vm383
      %v385 = vsel %vm384, %v376, %v381
      %v386 = vrsqrt.pop %v307
      %v387 = vmul.f32 %v386, %v307
      %v388 = vmul.f32 %v387, %v386
      %v389 = vmul.f32 0.5, %v388
      %v390 = vsub.f32 1.5, %v389
      %v391 = vmul.f32 %v386, %v390
      %vm392 = vweird.f32 %v307
      %vm393 = vweird.f32 %v386
      %vm394 = vmor %vm392, %vm393
      %v395 = vsel %vm394, %v386, %v391
      %v396 = vrsqrt.pop %v308
      %v397 = vmul.f32 %v396, %v308
      %v398 = vmul.f32 %v397, %v396
      %v399 = vmul.f32 0.5, %v398
      %v400 = vsub.f32 1.5, %v399
      %v401 = vmul.f32 %v396, %v400
      %vm402 = vweird.f32 %v308
      %vm403 = vweird.f32 %v396
      %vm404 = vmor %vm402, %vm403
      %v405 = vsel %vm404, %v396, %v401
      %v406 = vrsqrt.pop %v309
      %v407 = vmul.f32 %v406, %v309
      %v408 = vmul.f32 %v407, %v406
      %v409 = vmul.f32 0.5, %v408
      %v410 = vsub.f32 1.5, %v409
      %v411 = vmul.f32 %v406, %v410
      %vm412 = vweird.f32 %v309
      %vm413 = vweird.f32 %v406
      %vm414 = vmor %vm412, %vm413
      %v415 = vsel %vm414, %v406, %v411
      %v416 = vrsqrt.pop %v310
      %v417 = vmul.f32 %v416, %v310
      %v418 = vmul.f32 %v417, %v416
      %v419 = vmul.f32 0.5, %v418
      %v420 = vsub.f32 1.5, %v419
      %v421 = vmul.f32 %v416, %v420
      %vm422 = vweird.f32 %v310
      %vm423 = vweird.f32 %v416
      %vm424 = vmor %vm422, %vm423
      %v425 = vsel %vm424, %v416, %v421
      %v426 = vrsqrt.pop %v311
      %v427 = vmul.f32 %v426, %v311
      %v428 = vmul.f32 %v427, %v426
      %v429 = vmul.f32 0.5, %v428
      %v430 = vsub.f32 1.5, %v429
      %v431 = vmul.f32 %v426, %v430
      %vm432 = vweird.f32 %v311
      %vm433 = vweird.f32 %v426
      %vm434 = vmor %vm432, %vm433
      %v435 = vsel %vm434, %v426, %v431
      %v436 = vrsqrt.pop %v312
      %v437 = vmul.f32 %v436, %v312
      %v438 = vmul.f32 %v437, %v436
      %v439 = vmul.f32 0.5, %v438
      %v440 = vsub.f32 1.5, %v439
      %v441 = vmul.f32 %v436, %v440
      %vm442 = vweird.f32 %v312
      %vm443 = vweird.f32 %v436
      %vm444 = vmor %vm442, %vm443
      %v445 = vsel %vm444, %v436, %v441
      %v446 = vrsqrt.pop %v313
      %v447 = vmul.f32 %v446, %v313
      %v448 = vmul.f32 %v447, %v446
      %v449 = vmul.f32 0.5, %v448
      %v450 = vsub.f32 1.5, %v449
      %v451 = vmul.f32 %v446, %v450
      %vm452 = vweird.f32 %v313
      %vm453 = vweird.f32 %v446
      %vm454 = vmor %vm452, %vm453
      %v455 = vsel %vm454, %v446, %v451
      %v456 = vrsqrt.pop %v314
      %v457 = vmul.f32 %v456, %v314
      %v458 = vmul.f32 %v457, %v456
      %v459 = vmul.f32 0.5, %v458
      %v460 = vsub.f32 1.5, %v459
      %v461 = vmul.f32 %v456, %v460
      %vm462 = vweird.f32 %v314
      %vm463 = vweird.f32 %v456
      %vm464 = vmor %vm462, %vm463
      %v465 = vsel %vm464, %v456, %v461
      %v466 = vrsqrt.pop %v315
      %v467 = vmul.f32 %v466, %v315
      %v468 = vmul.f32 %v467, %v466
      %v469 = vmul.f32 0.5, %v468
      %v470 = vsub.f32 1.5, %v469
      %v471 = vmul.f32 %v466, %v470
      %vm472 = vweird.f32 %v315
      %vm473 = vweird.f32 %v466
      %vm474 = vmor %vm472, %vm473
      %v475 = vsel %vm474, %v466, %v471
      %v476 = vmul.f32 %v284, %v325
      %v477 = vmul.f32 %v285, %v335
      %v478 = vmul.f32 %v286, %v345
      %v479 = vmul.f32 %v287, %v355
      %v480 = vmul.f32 %v288, %v365
      %v481 = vmul.f32 %v289, %v375
      %v482 = vmul.f32 %v290, %v385
      %v483 = vmul.f32 %v291, %v395
      %v484 = vmul.f32 %v292, %v405
      %v485 = vmul.f32 %v293, %v415
      %v486 = vmul.f32 %v294, %v425
      %v487 = vmul.f32 %v295, %v435
      %v488 = vmul.f32 %v296, %v445
      %v489 = vmul.f32 %v297, %v455
      %v490 = vmul.f32 %v298, %v465
      %v491 = vmul.f32 %v299, %v475
      %v492 = vld [vmem:[#allocation6] sm:$0x1]
      %v494 = vperm.slane %v492, 0
      %v496 = vmul.f32 %v476, %v494
      %v497 = vmul.f32 %v477, %v494
      %v498 = vmul.f32 %v478, %v494
      %v499 = vmul.f32 %v479, %v494
      %v500 = vmul.f32 %v480, %v494
      %v501 = vmul.f32 %v481, %v494
      %v502 = vmul.f32 %v482, %v494
      %v503 = vmul.f32 %v483, %v494
      %v504 = vmul.f32 %v484, %v494
      %v505 = vmul.f32 %v485, %v494
      %v506 = vmul.f32 %v486, %v494
      %v507 = vmul.f32 %v487, %v494
      %v508 = vmul.f32 %v488, %v494
      %v509 = vmul.f32 %v489, %v494
      %v510 = vmul.f32 %v490, %v494
      %v511 = vmul.f32 %v491, %v494
      %v512 = vld [vmem:[%s2] sm:$0x1]
      %v514 = vperm.slane %v512, 0
      %v516 = vadd.f32 %v496, %v514
      %v517 = vadd.f32 %v497, %v514
      %v518 = vadd.f32 %v498, %v514
      %v519 = vadd.f32 %v499, %v514
      %v520 = vadd.f32 %v500, %v514
      %v521 = vadd.f32 %v501, %v514
      %v522 = vadd.f32 %v502, %v514
      %v523 = vadd.f32 %v503, %v514
      %v524 = vadd.f32 %v504, %v514
      %v525 = vadd.f32 %v505, %v514
      %v526 = vadd.f32 %v506, %v514
      %v527 = vadd.f32 %v507, %v514
      %v528 = vadd.f32 %v508, %v514
      %v529 = vadd.f32 %v509, %v514
      %v530 = vadd.f32 %v510, %v514
      %v531 = vadd.f32 %v511, %v514
      %v532 = vpack.c.bf16 %v517, %v516
      %v533 = vpack.c.bf16 %v519, %v518
      %v534 = vpack.c.bf16 %v521, %v520
      %v535 = vpack.c.bf16 %v523, %v522
      %v536 = vpack.c.bf16 %v525, %v524
      %v537 = vpack.c.bf16 %v527, %v526
      %v538 = vpack.c.bf16 %v529, %v528
      %v539 = vpack.c.bf16 %v531, %v530
      %v540 = vld [vmem:[#allocation8] sm:$0xf]
      %v541 = vld [vmem:[#allocation8 + $0x4] sm:$0xf]
      %v542 = vld [vmem:[#allocation8 + $0x8] sm:$0xf]
      %v543 = vld [vmem:[#allocation8 + $0xc] sm:$0xf]
      %v544 = vld [vmem:[#allocation8 + $0x10] sm:$0xf]
      %v545 = vld [vmem:[#allocation8 + $0x14] sm:$0xf]
      %v546 = vld [vmem:[#allocation8 + $0x18] sm:$0xf]
      %v547 = vld [vmem:[#allocation8 + $0x1c] sm:$0xf]
      %v548 = vld [vmem:[#allocation8 + $0x20] sm:$0xf]
      %v549 = vld [vmem:[#allocation8 + $0x24] sm:$0xf]
      %v550 = vld [vmem:[#allocation8 + $0x28] sm:$0xf]
      %v551 = vld [vmem:[#allocation8 + $0x2c] sm:$0xf]
      %v552 = vld [vmem:[#allocation8 + $0x30] sm:$0xf]
      %v553 = vld [vmem:[#allocation8 + $0x34] sm:$0xf]
      %v554 = vld [vmem:[#allocation8 + $0x38] sm:$0xf]
      %v555 = vld [vmem:[#allocation8 + $0x3c] sm:$0xf]
      %v556 = vld [vmem:[%s4] sm:$0x1]
      %v558 = vperm.slane %v556, 0
      %v576 = vunpack.c.l.b16 %v540
      %v577 = vunpack.c.l.b16 %v541
      %v578 = vunpack.c.l.b16 %v542
      %v579 = vunpack.c.l.b16 %v543
      %v580 = vunpack.c.l.b16 %v544
      %v581 = vunpack.c.l.b16 %v545
      %v582 = vunpack.c.l.b16 %v546
      %v583 = vunpack.c.l.b16 %v547
      %v584 = vunpack.c.l.b16 %v548
      %v585 = vunpack.c.l.b16 %v549
      %v586 = vunpack.c.l.b16 %v550
      %v587 = vunpack.c.l.b16 %v551
      %v588 = vunpack.c.l.b16 %v552
      %v589 = vunpack.c.l.b16 %v553
      %v590 = vunpack.c.l.b16 %v554
      %v591 = vunpack.c.l.b16 %v555
      %v592 = vpack.c.b16 %v577, %v576
      %v593 = vpack.c.b16 %v579, %v578
      %v594 = vpack.c.b16 %v581, %v580
      %v595 = vpack.c.b16 %v583, %v582
      %v596 = vpack.c.b16 %v585, %v584
      %v597 = vpack.c.b16 %v587, %v586
      %v598 = vpack.c.b16 %v589, %v588
      %v599 = vpack.c.b16 %v591, %v590
      %608 = vmatpush.bf16.msra.mxu0 %v599
      %609 = vmatpush.bf16.msra.mxu0 %v598
      %610 = vmatpush.bf16.msra.mxu0 %v597
      %611 = vmatpush.bf16.msra.mxu0 %v596
      %612 = vmatpush.bf16.msra.mxu0 %v595
      %613 = vmatpush.bf16.msra.mxu0 %v594
      %614 = vmatpush.bf16.msra.mxu0 %v593
      %615 = vmatpush.bf16.msra.mxu0 %v592
      %616 = vmatmul.bf16.gmra.mxu0 %v532
      %v617 = vpop.f32.mrf.mxu0
      %v618 = vadd.f32 %v558, %v617
      %v619 = vpop.f32.mrf.mxu0
      %v620 = vadd.f32 %v558, %v619
      %621 = vmatmul.bf16.gmra.mxu0 %v533
      %v622 = vpop.f32.mrf.mxu0
      %v623 = vadd.f32 %v558, %v622
      %v624 = vpop.f32.mrf.mxu0
      %v625 = vadd.f32 %v558, %v624
      %626 = vmatmul.bf16.gmra.mxu0 %v534
      %v627 = vpop.f32.mrf.mxu0
      %v628 = vadd.f32 %v558, %v627
      %v629 = vpop.f32.mrf.mxu0
      %v630 = vadd.f32 %v558, %v629
      %631 = vmatmul.bf16.gmra.mxu0 %v535
      %v632 = vpop.f32.mrf.mxu0
      %v633 = vadd.f32 %v558, %v632
      %v634 = vpop.f32.mrf.mxu0
      %v635 = vadd.f32 %v558, %v634
      %636 = vmatmul.bf16.gmra.mxu0 %v536
      %v637 = vpop.f32.mrf.mxu0
      %v638 = vadd.f32 %v558, %v637
      %v639 = vpop.f32.mrf.mxu0
      %v640 = vadd.f32 %v558, %v639
      %641 = vmatmul.bf16.gmra.mxu0 %v537
      %v642 = vpop.f32.mrf.mxu0
      %v643 = vadd.f32 %v558, %v642
      %v644 = vpop.f32.mrf.mxu0
      %v645 = vadd.f32 %v558, %v644
      %646 = vmatmul.bf16.gmra.mxu0 %v538
      %v647 = vpop.f32.mrf.mxu0
      %v648 = vadd.f32 %v558, %v647
      %v649 = vpop.f32.mrf.mxu0
      %v650 = vadd.f32 %v558, %v649
      %651 = vmatmul.bf16.gmra.mxu0 %v539
      %v652 = vpop.f32.mrf.mxu0
      %v653 = vadd.f32 %v558, %v652
      %v654 = vpop.f32.mrf.mxu0
      %v655 = vadd.f32 %v558, %v654
      %656 = vdwg.mxu0
      %v657 = vmax.f32 %v618, 0.0
      %v658 = vmax.f32 %v620, 0.0
      %v659 = vmax.f32 %v623, 0.0
      %v660 = vmax.f32 %v625, 0.0
      %v661 = vmax.f32 %v628, 0.0
      %v662 = vmax.f32 %v630, 0.0
      %v663 = vmax.f32 %v633, 0.0
      %v664 = vmax.f32 %v635, 0.0
      %v665 = vmax.f32 %v638, 0.0
      %v666 = vmax.f32 %v640, 0.0
      %v667 = vmax.f32 %v643, 0.0
      %v668 = vmax.f32 %v645, 0.0
      %v669 = vmax.f32 %v648, 0.0
      %v670 = vmax.f32 %v650, 0.0
      %v671 = vmax.f32 %v653, 0.0
      %v672 = vmax.f32 %v655, 0.0
      %v673 = vpack.c.bf16 %v657, %v657
      %v674 = vpack.c.bf16 %v658, %v658
      %v675 = vpack.c.bf16 %v659, %v659
      %v676 = vpack.c.bf16 %v660, %v660
      %v677 = vpack.c.bf16 %v661, %v661
      %v678 = vpack.c.bf16 %v662, %v662
      %v679 = vpack.c.bf16 %v663, %v663
      %v680 = vpack.c.bf16 %v664, %v664
      %v681 = vpack.c.bf16 %v665, %v665
      %v682 = vpack.c.bf16 %v666, %v666
      %v683 = vpack.c.bf16 %v667, %v667
      %v684 = vpack.c.bf16 %v668, %v668
      %v685 = vpack.c.bf16 %v669, %v669
      %v686 = vpack.c.bf16 %v670, %v670
      %v687 = vpack.c.bf16 %v671, %v671
      %v688 = vpack.c.bf16 %v672, %v672
      %689 = vst [vmem:[#allocation2] sm:$0xf] %v673
      %690 = vst [vmem:[#allocation2 + $0x4] sm:$0xf] %v674
      %691 = vst [vmem:[#allocation2 + $0x8] sm:$0xf] %v675
      %692 = vst [vmem:[#allocation2 + $0xc] sm:$0xf] %v676
      %693 = vst [vmem:[#allocation2 + $0x10] sm:$0xf] %v677
      %694 = vst [vmem:[#allocation2 + $0x14] sm:$0xf] %v678
      %695 = vst [vmem:[#allocation2 + $0x18] sm:$0xf] %v679
      %696 = vst [vmem:[#allocation2 + $0x1c] sm:$0xf] %v680
      %697 = vst [vmem:[#allocation2 + $0x20] sm:$0xf] %v681
      %698 = vst [vmem:[#allocation2 + $0x24] sm:$0xf] %v682
      %699 = vst [vmem:[#allocation2 + $0x28] sm:$0xf] %v683
      %700 = vst [vmem:[#allocation2 + $0x2c] sm:$0xf] %v684
      %701 = vst [vmem:[#allocation2 + $0x30] sm:$0xf] %v685
      %702 = vst [vmem:[#allocation2 + $0x34] sm:$0xf] %v686
      %703 = vst [vmem:[#allocation2 + $0x38] sm:$0xf] %v687
      %704 = vst [vmem:[#allocation2 + $0x3c] sm:$0xf] %v688
    $region49: #{tpu_custom_call.1} parent=1 // pred_fallthru
      _
    %v705 = vld [vmem:[#allocation2] sm:$0xf]
    %v706 = vld [vmem:[#allocation2 + $0x4] sm:$0xf]
    %v707 = vld [vmem:[#allocation2 + $0x8] sm:$0xf]
    %v708 = vld [vmem:[#allocation2 + $0xc] sm:$0xf]
    %v709 = vld [vmem:[#allocation2 + $0x10] sm:$0xf]
    %v710 = vld [vmem:[#allocation2 + $0x14] sm:$0xf]
    %v711 = vld [vmem:[#allocation2 + $0x18] sm:$0xf]
    %v712 = vld [vmem:[#allocation2 + $0x1c] sm:$0xf]
    %v713 = vld [vmem:[#allocation2 + $0x20] sm:$0xf]
    %v714 = vld [vmem:[#allocation2 + $0x24] sm:$0xf]
    %v715 = vld [vmem:[#allocation2 + $0x28] sm:$0xf]
    %v716 = vld [vmem:[#allocation2 + $0x2c] sm:$0xf]
    %v717 = vld [vmem:[#allocation2 + $0x30] sm:$0xf]
    %v718 = vld [vmem:[#allocation2 + $0x34] sm:$0xf]
    %v719 = vld [vmem:[#allocation2 + $0x38] sm:$0xf]
    %v720 = vld [vmem:[#allocation2 + $0x3c] sm:$0xf]
    %v721 = vld [vmem:[#allocation9] sm:$0xf]
    %v722 = vld [vmem:[#allocation9 + $0x4] sm:$0xf]
    %v723 = vld [vmem:[#allocation9 + $0x8] sm:$0xf]
    %v724 = vld [vmem:[#allocation9 + $0xc] sm:$0xf]
    %v725 = vld [vmem:[#allocation9 + $0x10] sm:$0xf]
    %v726 = vld [vmem:[#allocation9 + $0x14] sm:$0xf]
    %v727 = vld [vmem:[#allocation9 + $0x18] sm:$0xf]
    %v728 = vld [vmem:[#allocation9 + $0x1c] sm:$0xf]
    %v729 = vld [vmem:[#allocation9 + $0x20] sm:$0xf]
    %v730 = vld [vmem:[#allocation9 + $0x24] sm:$0xf]
    %v731 = vld [vmem:[#allocation9 + $0x28] sm:$0xf]
    %v732 = vld [vmem:[#allocation9 + $0x2c] sm:$0xf]
    %v733 = vld [vmem:[#allocation9 + $0x30] sm:$0xf]
    %v734 = vld [vmem:[#allocation9 + $0x34] sm:$0xf]
    %v735 = vld [vmem:[#allocation9 + $0x38] sm:$0xf]
    %v736 = vld [vmem:[#allocation9 + $0x3c] sm:$0xf]
    %v737 = vld [vmem:[%s6] sm:$0x1]
    %v739 = vperm.slane %v737, 0
    %v757 = vunpack.c.l.b16 %v705
    %v758 = vunpack.c.l.b16 %v706
    %v759 = vunpack.c.l.b16 %v707
    %v760 = vunpack.c.l.b16 %v708
    %v761 = vunpack.c.l.b16 %v709
    %v762 = vunpack.c.l.b16 %v710
    %v763 = vunpack.c.l.b16 %v711
    %v764 = vunpack.c.l.b16 %v712
    %v765 = vunpack.c.l.b16 %v713
    %v766 = vunpack.c.l.b16 %v714
    %v767 = vunpack.c.l.b16 %v715
    %v768 = vunpack.c.l.b16 %v716
    %v769 = vunpack.c.l.b16 %v717
    %v770 = vunpack.c.l.b16 %v718
    %v771 = vunpack.c.l.b16 %v719
    %v772 = vunpack.c.l.b16 %v720
    %v773 = vpack.c.b16 %v758, %v757
    %v774 = vpack.c.b16 %v760, %v759
    %v775 = vpack.c.b16 %v762, %v761
    %v776 = vpack.c.b16 %v764, %v763
    %v777 = vpack.c.b16 %v766, %v765
    %v778 = vpack.c.b16 %v768, %v767
    %v779 = vpack.c.b16 %v770, %v769
    %v780 = vpack.c.b16 %v772, %v771
    %v805 = vunpack.c.l.b16 %v721
    %v806 = vunpack.c.l.b16 %v722
    %v807 = vunpack.c.l.b16 %v723
    %v808 = vunpack.c.l.b16 %v724
    %v809 = vunpack.c.l.b16 %v725
    %v810 = vunpack.c.l.b16 %v726
    %v811 = vunpack.c.l.b16 %v727
    %v812 = vunpack.c.l.b16 %v728
    %v813 = vunpack.c.l.b16 %v729
    %v814 = vunpack.c.l.b16 %v730
    %v815 = vunpack.c.l.b16 %v731
    %v816 = vunpack.c.l.b16 %v732
    %v817 = vunpack.c.l.b16 %v733
    %v818 = vunpack.c.l.b16 %v734
    %v819 = vunpack.c.l.b16 %v735
    %v820 = vunpack.c.l.b16 %v736
    %v821 = vpack.c.b16 %v806, %v805
    %v822 = vpack.c.b16 %v808, %v807
    %v823 = vpack.c.b16 %v810, %v809
    %v824 = vpack.c.b16 %v812, %v811
    %v825 = vpack.c.b16 %v814, %v813
    %v826 = vpack.c.b16 %v816, %v815
    %v827 = vpack.c.b16 %v818, %v817
    %v828 = vpack.c.b16 %v820, %v819
    %837 = vmatpush.bf16.msra.mxu0 %v828
    %838 = vmatpush.bf16.msra.mxu0 %v827
    %839 = vmatpush.bf16.msra.mxu0 %v826
    %840 = vmatpush.bf16.msra.mxu0 %v825
    %841 = vmatpush.bf16.msra.mxu0 %v824
    %842 = vmatpush.bf16.msra.mxu0 %v823
    %843 = vmatpush.bf16.msra.mxu0 %v822
    %844 = vmatpush.bf16.msra.mxu0 %v821
    %845 = vmatmul.bf16.gmra.mxu0 %v773
    %v846 = vpop.f32.mrf.mxu0
    %v847 = vadd.f32 %v739, %v846
    %v848 = vpop.f32.mrf.mxu0
    %v849 = vadd.f32 %v739, %v848
    %850 = vmatmul.bf16.gmra.mxu0 %v774
    %v851 = vpop.f32.mrf.mxu0
    %v852 = vadd.f32 %v739, %v851
    %v853 = vpop.f32.mrf.mxu0
    %v854 = vadd.f32 %v739, %v853
    %855 = vmatmul.bf16.gmra.mxu0 %v775
    %v856 = vpop.f32.mrf.mxu0
    %v857 = vadd.f32 %v739, %v856
    %v858 = vpop.f32.mrf.mxu0
    %v859 = vadd.f32 %v739, %v858
    %860 = vmatmul.bf16.gmra.mxu0 %v776
    %v861 = vpop.f32.mrf.mxu0
    %v862 = vadd.f32 %v739, %v861
    %v863 = vpop.f32.mrf.mxu0
    %v864 = vadd.f32 %v739, %v863
    %865 = vmatmul.bf16.gmra.mxu0 %v777
    %v866 = vpop.f32.mrf.mxu0
    %v867 = vadd.f32 %v739, %v866
    %v868 = vpop.f32.mrf.mxu0
    %v869 = vadd.f32 %v739, %v868
    %870 = vmatmul.bf16.gmra.mxu0 %v778
    %v871 = vpop.f32.mrf.mxu0
    %v872 = vadd.f32 %v739, %v871
    %v873 = vpop.f32.mrf.mxu0
    %v874 = vadd.f32 %v739, %v873
    %875 = vmatmul.bf16.gmra.mxu0 %v779
    %v876 = vpop.f32.mrf.mxu0
    %v877 = vadd.f32 %v739, %v876
    %v878 = vpop.f32.mrf.mxu0
    %v879 = vadd.f32 %v739, %v878
    %880 = vmatmul.bf16.gmra.mxu0 %v780
    %v881 = vpop.f32.mrf.mxu0
    %v882 = vadd.f32 %v739, %v881
    %v883 = vpop.f32.mrf.mxu0
    %v884 = vadd.f32 %v739, %v883
    %885 = vdwg.mxu0
    %886 = vst [vmem:[#allocation11] sm:$0xff] %v847
    %887 = vst [vmem:[#allocation11 + $0x8] sm:$0xff] %v849
    %888 = vst [vmem:[#allocation11 + $0x10] sm:$0xff] %v852
    %889 = vst [vmem:[#allocation11 + $0x18] sm:$0xff] %v854
    %890 = vst [vmem:[#allocation11 + $0x20] sm:$0xff] %v857
    %891 = vst [vmem:[#allocation11 + $0x28] sm:$0xff] %v859
    %892 = vst [vmem:[#allocation11 + $0x30] sm:$0xff] %v862
    %893 = vst [vmem:[#allocation11 + $0x38] sm:$0xff] %v864
    %894 = vst [vmem:[#allocation11 + $0x40] sm:$0xff] %v867
    %895 = vst [vmem:[#allocation11 + $0x48] sm:$0xff] %v869
    %896 = vst [vmem:[#allocation11 + $0x50] sm:$0xff] %v872
    %897 = vst [vmem:[#allocation11 + $0x58] sm:$0xff] %v874
    %898 = vst [vmem:[#allocation11 + $0x60] sm:$0xff] %v877
    %899 = vst [vmem:[#allocation11 + $0x68] sm:$0xff] %v879
    %900 = vst [vmem:[#allocation11 + $0x70] sm:$0xff] %v882
    %901 = vst [vmem:[#allocation11 + $0x78] sm:$0xff] %v884
    // Predicated region
    $region50: #{tpu_custom_call.1} parent=1 // pred_check
      _
    $region51: #{tpu_custom_call.1} parent=1 // pred_check_branch
      %903 = sbr.rel (0) target = $region53
    $region52: #{tpu_custom_call.1} parent=1 // pred_region
      %905 = vsyncadd [#allocation5], 0
      %s906 = sshll.u32 [#allocation11], 4
      %s907 = int_to_ptr.vmem [resolvable:$true] %s906
      %s908 = sshll.u32 %s7, 4
      %s909 = int_to_ptr.hbm [resolvable:$true] %s908
      %914 = dma.vmem_to_hbm [thread:$0]  %s907, 2048, %s909, [#allocation5], 128, 128, 8
    $region53: #{tpu_custom_call.1} parent=1 // pred_fallthru
      _
    // Predicated region
    $region54: #{tpu_custom_call.1} parent=1 // pred_check
      _
    $region55: #{tpu_custom_call.1} parent=1 // pred_check_branch
      %916 = sbr.rel (0) target = $region57
    $region56: #{tpu_custom_call.1} parent=1 // pred_region
      %918 = dma.done [#allocation5], 2048
    $region57: #{tpu_custom_call.1} parent=1 // pred_fallthru
      _
    %919 = vsyncpa [#allocation4], 1
    %920 = vsyncpa [#allocation7], 1
    %921 = vsyncpa [#allocation10], 1
    %922 = vsyncpa [#allocation5], 1

// kernel: tpu_custom_call.1
$region0: #{tpu_custom_call.1}
  #allocation0 [shape = 'u32[]', space=smem, size = 0x4, offset = 0x4, fixed_abs, tag = 'smem constant byte address 0x4 - core index']
  #allocation1 [shape = 'u32[72,128]{1,0:T(1,128)}', space=vmem, size = 0x9000, scoped, tag = 'internal scratch']
  #allocation2 [shape = 'bf16[128,128]{1,0:T(8,128)(2,1)}', space=vmem, size = 0x8000, scoped, tag = 'scratch operand']
  %s0 = inlined_call_operand.hbm [shape: bf16[128,128], index: 0, kind: input, shape index: {}]
  %s1 = inlined_call_operand.hbm [shape: f32[1,128], index: 1, kind: input, shape index: {}]
  %s2 = inlined_call_operand.vmem [shape: f32[1,128], index: 2, kind: input, shape index: {}]
  %s3 = inlined_call_operand.hbm [shape: bf16[128,128], index: 3, kind: input, shape index: {}]
  %s4 = inlined_call_operand.vmem [shape: f32[1,128], index: 4, kind: input, shape index: {}]
  %s5 = inlined_call_operand.hbm [shape: bf16[128,128], index: 5, kind: input, shape index: {}]
  %s6 = inlined_call_operand.vmem [shape: f32[1,128], index: 6, kind: input, shape index: {}]
  %s7 = inlined_call_operand.hbm [shape: f32[128,128], index: 7, kind: output, shape index: {}]
  %s8 = sld [smem:[#allocation0]]
  $region58: #{tpu_custom_call.1} parent=0
    _
  %s10 = ssub.s32 1, %s8
  %s11 = scalar_select 0, %s10, %s8
  $region1: #{tpu_custom_call.1} parent=0
    #allocation3 [shape = 'u8[32768]{0}', space=vmem, size = 0x8000, scoped, tag = 'input window, operand 0, single buffered']
    #allocation4 [shape = 's32[1]{0}', space=sflag, size = 0x4, scoped, tag = 'scoped memory for tpu_custom_call.1']
    #allocation5 [shape = 's32[1]{0}', space=sflag, size = 0x4, scoped, tag = 'scoped memory for tpu_custom_call.1']
    #allocation6 [shape = 'u8[512]{0}', space=vmem, size = 0x400, scoped, tag = 'input window, operand 1, single buffered']
    #allocation7 [shape = 's32[1]{0}', space=sflag, size = 0x4, scoped, tag = 'scoped memory for tpu_custom_call.1']
    #allocation8 [shape = 'u8[32768]{0}', space=vmem, size = 0x8000, scoped, tag = 'input window, operand 3, single buffered']
    #allocation9 [shape = 'u8[32768]{0}', space=vmem, size = 0x8000, scoped, tag = 'input window, operand 5, single buffered']
    #allocation10 [shape = 's32[1]{0}', space=sflag, size = 0x4, scoped, tag = 'scoped memory for tpu_custom_call.1']
    #allocation11 [shape = 'u8[65536]{0}', space=vmem, size = 0x10000, scoped, tag = 'output window, operand 0, single buffered']
    %12 = vsyncpa [#allocation4], 0
    %13 = vsyncpa [#allocation7], 0
    %14 = vsyncpa [#allocation10], 0
    %15 = vsyncpa [#allocation5], 0
    // Predicated region
    $region2: #{tpu_custom_call.1} parent=1 // pred_check
      _
    $region3: #{tpu_custom_call.1} parent=1 // pred_check_branch
      %17 = sbr.rel (0) target = $region5
    $region4: #{tpu_custom_call.1} parent=1 // pred_region
      %19 = vsyncadd [#allocation4], 0
      %s20 = sshll.u32 %s0, 4
      %s21 = int_to_ptr.hbm [resolvable:$true] %s20
      %s22 = sshll.u32 [#allocation3], 4
      %s23 = int_to_ptr.vmem [resolvable:$true] %s22
      %28 = dma.hbm_to_vmem [thread:$0]  %s21, 1024, %s23, [#allocation4], 64, 64, 4
    $region5: #{tpu_custom_call.1} parent=1 // pred_fallthru
      _
    // Predicated region
    $region6: #{tpu_custom_call.1} parent=1 // pred_check
      _
    $region7: #{tpu_custom_call.1} parent=1 // pred_check_branch
      %30 = sbr.rel (0) target = $region9
    $region8: #{tpu_custom_call.1} parent=1 // pred_region
      %32 = vsyncadd [#allocation7], 0
      %s34 = sshll.u32 %s1, 4
      %s35 = int_to_ptr.hbm [resolvable:$true] %s34
      %s36 = sshll.u32 [#allocation6], 4
      %s37 = int_to_ptr.vmem [resolvable:$true] %s36
      %39 = dma.hbm_to_vmem [thread:$0]  %s35, 16, %s37, [#allocation7]
    $region9: #{tpu_custom_call.1} parent=1 // pred_fallthru
      _
    // Predicated region
    $region10: #{tpu_custom_call.1} parent=1 // pred_check
      _
    $region11: #{tpu_custom_call.1} parent=1 // pred_check_branch
      %41 = sbr.rel (0) target = $region13
    $region12: #{tpu_custom_call.1} parent=1 // pred_region
      _
    $region13: #{tpu_custom_call.1} parent=1 // pred_fallthru
      _
    // Predicated region
    $region14: #{tpu_custom_call.1} parent=1 // pred_check
      _
    $region15: #{tpu_custom_call.1} parent=1 // pred_check_branch
      %43 = sbr.rel (0) target = $region17
    $region16: #{tpu_custom_call.1} parent=1 // pred_region
      %45 = vsyncadd [#allocation7], 0
      %s46 = sshll.u32 %s3, 4
      %s47 = int_to_ptr.hbm [resolvable:$true] %s46
      %s48 = sshll.u32 [#allocation8], 4
      %s49 = int_to_ptr.vmem [resolvable:$true] %s48
      %54 = dma.hbm_to_vmem [thread:$0]  %s47, 1024, %s49, [#allocation7], 64, 64, 4
    $region17: #{tpu_custom_call.1} parent=1 // pred_fallthru
      _
    // Predicated region
    $region18: #{tpu_custom_call.1} parent=1 // pred_check
      _
    $region19: #{tpu_custom_call.1} parent=1 // pred_check_branch
      %56 = sbr.rel (0) target = $region21
    $region20: #{tpu_custom_call.1} parent=1 // pred_region
      _
    $region21: #{tpu_custom_call.1} parent=1 // pred_fallthru
      _
    // Predicated region
    $region22: #{tpu_custom_call.1} parent=1 // pred_check
      _
    $region23: #{tpu_custom_call.1} parent=1 // pred_check_branch
      %58 = sbr.rel (0) target = $region25
    $region24: #{tpu_custom_call.1} parent=1 // pred_region
      %60 = vsyncadd [#allocation10], 0
      %s61 = sshll.u32 %s5, 4
      %s62 = int_to_ptr.hbm [resolvable:$true] %s61
      %s63 = sshll.u32 [#allocation9], 4
      %s64 = int_to_ptr.vmem [resolvable:$true] %s63
      %69 = dma.hbm_to_vmem [thread:$0]  %s62, 1024, %s64, [#allocation10], 64, 64, 4
    $region25: #{tpu_custom_call.1} parent=1 // pred_fallthru
      _
    // Predicated region
    $region26: #{tpu_custom_call.1} parent=1 // pred_check
      _
    $region27: #{tpu_custom_call.1} parent=1 // pred_check_branch
      %71 = sbr.rel (0) target = $region29
    $region28: #{tpu_custom_call.1} parent=1 // pred_region
      _
    $region29: #{tpu_custom_call.1} parent=1 // pred_fallthru
      _
    // Predicated region
    $region30: #{tpu_custom_call.1} parent=1 // pred_check
      _
    $region31: #{tpu_custom_call.1} parent=1 // pred_check_branch
      %73 = sbr.rel (0) target = $region33
    $region32: #{tpu_custom_call.1} parent=1 // pred_region
      %75 = dma.done [#allocation4], 1024
    $region33: #{tpu_custom_call.1} parent=1 // pred_fallthru
      _
    // Predicated region
    $region34: #{tpu_custom_call.1} parent=1 // pred_check
      _
    $region35: #{tpu_custom_call.1} parent=1 // pred_check_branch
      %77 = sbr.rel (0) target = $region37
    $region36: #{tpu_custom_call.1} parent=1 // pred_region
      %79 = dma.done [#allocation7], 16
    $region37: #{tpu_custom_call.1} parent=1 // pred_fallthru
      _
    // Predicated region
    $region38: #{tpu_custom_call.1} parent=1 // pred_check
      _
    $region39: #{tpu_custom_call.1} parent=1 // pred_check_branch
      %81 = sbr.rel (0) target = $region41
    $region40: #{tpu_custom_call.1} parent=1 // pred_region
      %83 = dma.done [#allocation7], 1024
    $region41: #{tpu_custom_call.1} parent=1 // pred_fallthru
      _
    // Predicated region
    $region42: #{tpu_custom_call.1} parent=1 // pred_check
      _
    $region43: #{tpu_custom_call.1} parent=1 // pred_check_branch
      %85 = sbr.rel (0) target = $region45
    $region44: #{tpu_custom_call.1} parent=1 // pred_region
      %87 = dma.done [#allocation10], 1024
    $region45: #{tpu_custom_call.1} parent=1 // pred_fallthru
      _
    %p88 = scmp.eq.s32.totalorder 0, 0
    // Predicated region
    $region46: #{tpu_custom_call.1} parent=1 // pred_check
      %p89 = pneg %p88
    $region47: #{tpu_custom_call.1} parent=1 // pred_check_branch
      %91 = sbr.rel (%p89) target = $region49
    $region48: #{tpu_custom_call.1} parent=1 // pred_region
      %v92 = vld [vmem:[#allocation3] sm:$0xf]
      %v93 = vld [vmem:[#allocation3 + $0x4] sm:$0xf]
      %v94 = vld [vmem:[#allocation3 + $0x8] sm:$0xf]
      %v95 = vld [vmem:[#allocation3 + $0xc] sm:$0xf]
      %v96 = vld [vmem:[#allocation3 + $0x10] sm:$0xf]
      %v97 = vld [vmem:[#allocation3 + $0x14] sm:$0xf]
      %v98 = vld [vmem:[#allocation3 + $0x18] sm:$0xf]
      %v99 = vld [vmem:[#allocation3 + $0x1c] sm:$0xf]
      %v100 = vld [vmem:[#allocation3 + $0x20] sm:$0xf]
      %v101 = vld [vmem:[#allocation3 + $0x24] sm:$0xf]
      %v102 = vld [vmem:[#allocation3 + $0x28] sm:$0xf]
      %v103 = vld [vmem:[#allocation3 + $0x2c] sm:$0xf]
      %v104 = vld [vmem:[#allocation3 + $0x30] sm:$0xf]
      %v105 = vld [vmem:[#allocation3 + $0x34] sm:$0xf]
      %v106 = vld [vmem:[#allocation3 + $0x38] sm:$0xf]
      %v107 = vld [vmem:[#allocation3 + $0x3c] sm:$0xf]
      %v108 = vunpack.c.l.bf16 %v92
      %v109 = vunpack.c.l.bf16 %v93
      %v110 = vunpack.c.l.bf16 %v94
      %v111 = vunpack.c.l.bf16 %v95
      %v112 = vunpack.c.l.bf16 %v96
      %v113 = vunpack.c.l.bf16 %v97
      %v114 = vunpack.c.l.bf16 %v98
      %v115 = vunpack.c.l.bf16 %v99
      %v116 = vunpack.c.l.bf16 %v100
      %v117 = vunpack.c.l.bf16 %v101
      %v118 = vunpack.c.l.bf16 %v102
      %v119 = vunpack.c.l.bf16 %v103
      %v120 = vunpack.c.l.bf16 %v104
      %v121 = vunpack.c.l.bf16 %v105
      %v122 = vunpack.c.l.bf16 %v106
      %v123 = vunpack.c.l.bf16 %v107
      %124 = vadd.xlane.f32.xlu0 %v108
      %v125 = vpop.xlane.xlu0 %124
      %126 = vadd.xlane.f32.xlu0 %v109
      %v127 = vpop.xlane.xlu0 %126
      %128 = vadd.xlane.f32.xlu0 %v110
      %v129 = vpop.xlane.xlu0 %128
      %130 = vadd.xlane.f32.xlu0 %v111
      %v131 = vpop.xlane.xlu0 %130
      %132 = vadd.xlane.f32.xlu0 %v112
      %v133 = vpop.xlane.xlu0 %132
      %134 = vadd.xlane.f32.xlu0 %v113
      %v135 = vpop.xlane.xlu0 %134
      %136 = vadd.xlane.f32.xlu0 %v114
      %v137 = vpop.xlane.xlu0 %136
      %138 = vadd.xlane.f32.xlu0 %v115
      %v139 = vpop.xlane.xlu0 %138
      %140 = vadd.xlane.f32.xlu0 %v116
      %v141 = vpop.xlane.xlu0 %140
      %142 = vadd.xlane.f32.xlu0 %v117
      %v143 = vpop.xlane.xlu0 %142
      %144 = vadd.xlane.f32.xlu0 %v118
      %v145 = vpop.xlane.xlu0 %144
      %146 = vadd.xlane.f32.xlu0 %v119
      %v147 = vpop.xlane.xlu0 %146
      %148 = vadd.xlane.f32.xlu0 %v120
      %v149 = vpop.xlane.xlu0 %148
      %150 = vadd.xlane.f32.xlu0 %v121
      %v151 = vpop.xlane.xlu0 %150
      %152 = vadd.xlane.f32.xlu0 %v122
      %v153 = vpop.xlane.xlu0 %152
      %154 = vadd.xlane.f32.xlu0 %v123
      %v155 = vpop.xlane.xlu0 %154
      %v156 = vmul.f32 %v108, %v108
      %v157 = vmul.f32 %v109, %v109
      %v158 = vmul.f32 %v110, %v110
      %v159 = vmul.f32 %v111, %v111
      %v160 = vmul.f32 %v112, %v112
      %v161 = vmul.f32 %v113, %v113
      %v162 = vmul.f32 %v114, %v114
      %v163 = vmul.f32 %v115, %v115
      %v164 = vmul.f32 %v116, %v116
      %v165 = vmul.f32 %v117, %v117
      %v166 = vmul.f32 %v118, %v118
      %v167 = vmul.f32 %v119, %v119
      %v168 = vmul.f32 %v120, %v120
      %v169 = vmul.f32 %v121, %v121
      %v170 = vmul.f32 %v122, %v122
      %v171 = vmul.f32 %v123, %v123
      %172 = vadd.xlane.f32.xlu0 %v156
      %v173 = vpop.xlane.xlu0 %172
      %174 = vadd.xlane.f32.xlu0 %v157
      %v175 = vpop.xlane.xlu0 %174
      %176 = vadd.xlane.f32.xlu0 %v158
      %v177 = vpop.xlane.xlu0 %176
      %178 = vadd.xlane.f32.xlu0 %v159
      %v179 = vpop.xlane.xlu0 %178
      %180 = vadd.xlane.f32.xlu0 %v160
      %v181 = vpop.xlane.xlu0 %180
      %182 = vadd.xlane.f32.xlu0 %v161
      %v183 = vpop.xlane.xlu0 %182
      %184 = vadd.xlane.f32.xlu0 %v162
      %v185 = vpop.xlane.xlu0 %184
      %186 = vadd.xlane.f32.xlu0 %v163
      %v187 = vpop.xlane.xlu0 %186
      %188 = vadd.xlane.f32.xlu0 %v164
      %v189 = vpop.xlane.xlu0 %188
      %190 = vadd.xlane.f32.xlu0 %v165
      %v191 = vpop.xlane.xlu0 %190
      %192 = vadd.xlane.f32.xlu0 %v166
      %v193 = vpop.xlane.xlu0 %192
      %194 = vadd.xlane.f32.xlu0 %v167
      %v195 = vpop.xlane.xlu0 %194
      %196 = vadd.xlane.f32.xlu0 %v168
      %v197 = vpop.xlane.xlu0 %196
      %198 = vadd.xlane.f32.xlu0 %v169
      %v199 = vpop.xlane.xlu0 %198
      %200 = vadd.xlane.f32.xlu0 %v170
      %v201 = vpop.xlane.xlu0 %200
      %202 = vadd.xlane.f32.xlu0 %v171
      %v203 = vpop.xlane.xlu0 %202
      %v204 = vmul.f32 %v125, 0.010416667
      %v205 = vmul.f32 %v127, 0.010416667
      %v206 = vmul.f32 %v129, 0.010416667
      %v207 = vmul.f32 %v131, 0.010416667
      %v208 = vmul.f32 %v133, 0.010416667
      %v209 = vmul.f32 %v135, 0.010416667
      %v210 = vmul.f32 %v137, 0.010416667
      %v211 = vmul.f32 %v139, 0.010416667
      %v212 = vmul.f32 %v141, 0.010416667
      %v213 = vmul.f32 %v143, 0.010416667
      %v214 = vmul.f32 %v145, 0.010416667
      %v215 = vmul.f32 %v147, 0.010416667
      %v216 = vmul.f32 %v149, 0.010416667
      %v217 = vmul.f32 %v151, 0.010416667
      %v218 = vmul.f32 %v153, 0.010416667
      %v219 = vmul.f32 %v155, 0.010416667
      %v220 = vmul.f32 %v173, 0.010416667
      %v221 = vmul.f32 %v175, 0.010416667
      %v222 = vmul.f32 %v177, 0.010416667
      %v223 = vmul.f32 %v179, 0.010416667
      %v224 = vmul.f32 %v181, 0.010416667
      %v225 = vmul.f32 %v183, 0.010416667
      %v226 = vmul.f32 %v185, 0.010416667
      %v227 = vmul.f32 %v187, 0.010416667
      %v228 = vmul.f32 %v189, 0.010416667
      %v229 = vmul.f32 %v191, 0.010416667
      %v230 = vmul.f32 %v193, 0.010416667
      %v231 = vmul.f32 %v195, 0.010416667
      %v232 = vmul.f32 %v197, 0.010416667
      %v233 = vmul.f32 %v199, 0.010416667
      %v234 = vmul.f32 %v201, 0.010416667
      %v235 = vmul.f32 %v203, 0.010416667
      %v236 = vmul.f32 %v204, %v204
      %v237 = vmul.f32 %v205, %v205
      %v238 = vmul.f32 %v206, %v206
      %v239 = vmul.f32 %v207, %v207
      %v240 = vmul.f32 %v208, %v208
      %v241 = vmul.f32 %v209, %v209
      %v242 = vmul.f32 %v210, %v210
      %v243 = vmul.f32 %v211, %v211
      %v244 = vmul.f32 %v212, %v212
      %v245 = vmul.f32 %v213, %v213
      %v246 = vmul.f32 %v214, %v214
      %v247 = vmul.f32 %v215, %v215
      %v248 = vmul.f32 %v216, %v216
      %v249 = vmul.f32 %v217, %v217
      %v250 = vmul.f32 %v218, %v218
      %v251 = vmul.f32 %v219, %v219
      %v252 = vsub.f32 %v220, %v236
      %v253 = vsub.f32 %v221, %v237
      %v254 = vsub.f32 %v222, %v238
      %v255 = vsub.f32 %v223, %v239
      %v256 = vsub.f32 %v224, %v240
      %v257 = vsub.f32 %v225, %v241
      %v258 = vsub.f32 %v226, %v242
      %v259 = vsub.f32 %v227, %v243
      %v260 = vsub.f32 %v228, %v244
      %v261 = vsub.f32 %v229, %v245
      %v262 = vsub.f32 %v230, %v246
      %v263 = vsub.f32 %v231, %v247
      %v264 = vsub.f32 %v232, %v248
      %v265 = vsub.f32 %v233, %v249
      %v266 = vsub.f32 %v234, %v250
      %v267 = vsub.f32 %v235, %v251
      %v268 = vmax.f32 %v252, 0.0
      %v269 = vmax.f32 %v253, 0.0
      %v270 = vmax.f32 %v254, 0.0
      %v271 = vmax.f32 %v255, 0.0
      %v272 = vmax.f32 %v256, 0.0
      %v273 = vmax.f32 %v257, 0.0
      %v274 = vmax.f32 %v258, 0.0
      %v275 = vmax.f32 %v259, 0.0
      %v276 = vmax.f32 %v260, 0.0
      %v277 = vmax.f32 %v261, 0.0
      %v278 = vmax.f32 %v262, 0.0
      %v279 = vmax.f32 %v263, 0.0
      %v280 = vmax.f32 %v264, 0.0
      %v281 = vmax.f32 %v265, 0.0
      %v282 = vmax.f32 %v266, 0.0
      %v283 = vmax.f32 %v267, 0.0
      %v284 = vsub.f32 %v108, %v204
      %v285 = vsub.f32 %v109, %v205
      %v286 = vsub.f32 %v110, %v206
      %v287 = vsub.f32 %v111, %v207
      %v288 = vsub.f32 %v112, %v208
      %v289 = vsub.f32 %v113, %v209
      %v290 = vsub.f32 %v114, %v210
      %v291 = vsub.f32 %v115, %v211
      %v292 = vsub.f32 %v116, %v212
      %v293 = vsub.f32 %v117, %v213
      %v294 = vsub.f32 %v118, %v214
      %v295 = vsub.f32 %v119, %v215
      %v296 = vsub.f32 %v120, %v216
      %v297 = vsub.f32 %v121, %v217
      %v298 = vsub.f32 %v122, %v218
      %v299 = vsub.f32 %v123, %v219
      %v300 = vadd.f32 %v268, 1e-05
      %v301 = vadd.f32 %v269, 1e-05
      %v302 = vadd.f32 %v270, 1e-05
      %v303 = vadd.f32 %v271, 1e-05
      %v304 = vadd.f32 %v272, 1e-05
      %v305 = vadd.f32 %v273, 1e-05
      %v306 = vadd.f32 %v274, 1e-05
      %v307 = vadd.f32 %v275, 1e-05
      %v308 = vadd.f32 %v276, 1e-05
      %v309 = vadd.f32 %v277, 1e-05
      %v310 = vadd.f32 %v278, 1e-05
      %v311 = vadd.f32 %v279, 1e-05
      %v312 = vadd.f32 %v280, 1e-05
      %v313 = vadd.f32 %v281, 1e-05
      %v314 = vadd.f32 %v282, 1e-05
      %v315 = vadd.f32 %v283, 1e-05
      %v316 = vrsqrt.pop %v300
      %v317 = vmul.f32 %v316, %v300
      %v318 = vmul.f32 %v317, %v316
      %v319 = vmul.f32 0.5, %v318
      %v320 = vsub.f32 1.5, %v319
      %v321 = vmul.f32 %v316, %v320
      %vm322 = vweird.f32 %v300
      %vm323 = vweird.f32 %v316
      %vm324 = vmor %vm322, %vm323
      %v325 = vsel %vm324, %v316, %v321
      %v326 = vrsqrt.pop %v301
      %v327 = vmul.f32 %v326, %v301
      %v328 = vmul.f32 %v327, %v326
      %v329 = vmul.f32 0.5, %v328
      %v330 = vsub.f32 1.5, %v329
      %v331 = vmul.f32 %v326, %v330
      %vm332 = vweird.f32 %v301
      %vm333 = vweird.f32 %v326
      %vm334 = vmor %vm332, %vm333
      %v335 = vsel %vm334, %v326, %v331
      %v336 = vrsqrt.pop %v302
      %v337 = vmul.f32 %v336, %v302
      %v338 = vmul.f32 %v337, %v336
      %v339 = vmul.f32 0.5, %v338
      %v340 = vsub.f32 1.5, %v339
      %v341 = vmul.f32 %v336, %v340
      %vm342 = vweird.f32 %v302
      %vm343 = vweird.f32 %v336
      %vm344 = vmor %vm342, %vm343
      %v345 = vsel %vm344, %v336, %v341
      %v346 = vrsqrt.pop %v303
      %v347 = vmul.f32 %v346, %v303
      %v348 = vmul.f32 %v347, %v346
      %v349 = vmul.f32 0.5, %v348
      %v350 = vsub.f32 1.5, %v349
      %v351 = vmul.f32 %v346, %v350
      %vm352 = vweird.f32 %v303
      %vm353 = vweird.f32 %v346
      %vm354 = vmor %vm352, %vm353
      %v355 = vsel %vm354, %v346, %v351
      %v356 = vrsqrt.pop %v304
      %v357 = vmul.f32 %v356, %v304
      %v358 = vmul.f32 %v357, %v356
      %v359 = vmul.f32 0.5, %v358
      %v360 = vsub.f32 1.5, %v359
      %v361 = vmul.f32 %v356, %v360
      %vm362 = vweird.f32 %v304
      %vm363 = vweird.f32 %v356
      %vm364 = vmor %vm362, %vm363
      %v365 = vsel %vm364, %v356, %v361
      %v366 = vrsqrt.pop %v305
      %v367 = vmul.f32 %v366, %v305
      %v368 = vmul.f32 %v367, %v366
      %v369 = vmul.f32 0.5, %v368
      %v370 = vsub.f32 1.5, %v369
      %v371 = vmul.f32 %v366, %v370
      %vm372 = vweird.f32 %v305
      %vm373 = vweird.f32 %v366
      %vm374 = vmor %vm372, %vm373
      %v375 = vsel %vm374, %v366, %v371
      %v376 = vrsqrt.pop %v306
      %v377 = vmul.f32 %v376, %v306
      %v378 = vmul.f32 %v377, %v376
      %v379 = vmul.f32 0.5, %v378
      %v380 = vsub.f32 1.5, %v379
      %v381 = vmul.f32 %v376, %v380
      %vm382 = vweird.f32 %v306
      %vm383 = vweird.f32 %v376
      %vm384 = vmor %vm382, %vm383
      %v385 = vsel %vm384, %v376, %v381
      %v386 = vrsqrt.pop %v307
      %v387 = vmul.f32 %v386, %v307
      %v388 = vmul.f32 %v387, %v386
      %v389 = vmul.f32 0.5, %v388
      %v390 = vsub.f32 1.5, %v389
      %v391 = vmul.f32 %v386, %v390
      %vm392 = vweird.f32 %v307
      %vm393 = vweird.f32 %v386
      %vm394 = vmor %vm392, %vm393
      %v395 = vsel %vm394, %v386, %v391
      %v396 = vrsqrt.pop %v308
      %v397 = vmul.f32 %v396, %v308
      %v398 = vmul.f32 %v397, %v396
      %v399 = vmul.f32 0.5, %v398
      %v400 = vsub.f32 1.5, %v399
      %v401 = vmul.f32 %v396, %v400
      %vm402 = vweird.f32 %v308
      %vm403 = vweird.f32 %v396
      %vm404 = vmor %vm402, %vm403
      %v405 = vsel %vm404, %v396, %v401
      %v406 = vrsqrt.pop %v309
      %v407 = vmul.f32 %v406, %v309
      %v408 = vmul.f32 %v407, %v406
      %v409 = vmul.f32 0.5, %v408
      %v410 = vsub.f32 1.5, %v409
      %v411 = vmul.f32 %v406, %v410
      %vm412 = vweird.f32 %v309
      %vm413 = vweird.f32 %v406
      %vm414 = vmor %vm412, %vm413
      %v415 = vsel %vm414, %v406, %v411
      %v416 = vrsqrt.pop %v310
      %v417 = vmul.f32 %v416, %v310
      %v418 = vmul.f32 %v417, %v416
      %v419 = vmul.f32 0.5, %v418
      %v420 = vsub.f32 1.5, %v419
      %v421 = vmul.f32 %v416, %v420
      %vm422 = vweird.f32 %v310
      %vm423 = vweird.f32 %v416
      %vm424 = vmor %vm422, %vm423
      %v425 = vsel %vm424, %v416, %v421
      %v426 = vrsqrt.pop %v311
      %v427 = vmul.f32 %v426, %v311
      %v428 = vmul.f32 %v427, %v426
      %v429 = vmul.f32 0.5, %v428
      %v430 = vsub.f32 1.5, %v429
      %v431 = vmul.f32 %v426, %v430
      %vm432 = vweird.f32 %v311
      %vm433 = vweird.f32 %v426
      %vm434 = vmor %vm432, %vm433
      %v435 = vsel %vm434, %v426, %v431
      %v436 = vrsqrt.pop %v312
      %v437 = vmul.f32 %v436, %v312
      %v438 = vmul.f32 %v437, %v436
      %v439 = vmul.f32 0.5, %v438
      %v440 = vsub.f32 1.5, %v439
      %v441 = vmul.f32 %v436, %v440
      %vm442 = vweird.f32 %v312
      %vm443 = vweird.f32 %v436
      %vm444 = vmor %vm442, %vm443
      %v445 = vsel %vm444, %v436, %v441
      %v446 = vrsqrt.pop %v313
      %v447 = vmul.f32 %v446, %v313
      %v448 = vmul.f32 %v447, %v446
      %v449 = vmul.f32 0.5, %v448
      %v450 = vsub.f32 1.5, %v449
      %v451 = vmul.f32 %v446, %v450
      %vm452 = vweird.f32 %v313
      %vm453 = vweird.f32 %v446
      %vm454 = vmor %vm452, %vm453
      %v455 = vsel %vm454, %v446, %v451
      %v456 = vrsqrt.pop %v314
      %v457 = vmul.f32 %v456, %v314
      %v458 = vmul.f32 %v457, %v456
      %v459 = vmul.f32 0.5, %v458
      %v460 = vsub.f32 1.5, %v459
      %v461 = vmul.f32 %v456, %v460
      %vm462 = vweird.f32 %v314
      %vm463 = vweird.f32 %v456
      %vm464 = vmor %vm462, %vm463
      %v465 = vsel %vm464, %v456, %v461
      %v466 = vrsqrt.pop %v315
      %v467 = vmul.f32 %v466, %v315
      %v468 = vmul.f32 %v467, %v466
      %v469 = vmul.f32 0.5, %v468
      %v470 = vsub.f32 1.5, %v469
      %v471 = vmul.f32 %v466, %v470
      %vm472 = vweird.f32 %v315
      %vm473 = vweird.f32 %v466
      %vm474 = vmor %vm472, %vm473
      %v475 = vsel %vm474, %v466, %v471
      %v476 = vmul.f32 %v284, %v325
      %v477 = vmul.f32 %v285, %v335
      %v478 = vmul.f32 %v286, %v345
      %v479 = vmul.f32 %v287, %v355
      %v480 = vmul.f32 %v288, %v365
      %v481 = vmul.f32 %v289, %v375
      %v482 = vmul.f32 %v290, %v385
      %v483 = vmul.f32 %v291, %v395
      %v484 = vmul.f32 %v292, %v405
      %v485 = vmul.f32 %v293, %v415
      %v486 = vmul.f32 %v294, %v425
      %v487 = vmul.f32 %v295, %v435
      %v488 = vmul.f32 %v296, %v445
      %v489 = vmul.f32 %v297, %v455
      %v490 = vmul.f32 %v298, %v465
      %v491 = vmul.f32 %v299, %v475
      %v492 = vld [vmem:[#allocation6] sm:$0x1]
      %v494 = vperm.slane %v492, 0
      %v496 = vmul.f32 %v476, %v494
      %v497 = vmul.f32 %v477, %v494
      %v498 = vmul.f32 %v478, %v494
      %v499 = vmul.f32 %v479, %v494
      %v500 = vmul.f32 %v480, %v494
      %v501 = vmul.f32 %v481, %v494
      %v502 = vmul.f32 %v482, %v494
      %v503 = vmul.f32 %v483, %v494
      %v504 = vmul.f32 %v484, %v494
      %v505 = vmul.f32 %v485, %v494
      %v506 = vmul.f32 %v486, %v494
      %v507 = vmul.f32 %v487, %v494
      %v508 = vmul.f32 %v488, %v494
      %v509 = vmul.f32 %v489, %v494
      %v510 = vmul.f32 %v490, %v494
      %v511 = vmul.f32 %v491, %v494
      %v512 = vld [vmem:[%s2] sm:$0x1]
      %v514 = vperm.slane %v512, 0
      %v516 = vadd.f32 %v496, %v514
      %v517 = vadd.f32 %v497, %v514
      %v518 = vadd.f32 %v498, %v514
      %v519 = vadd.f32 %v499, %v514
      %v520 = vadd.f32 %v500, %v514
      %v521 = vadd.f32 %v501, %v514
      %v522 = vadd.f32 %v502, %v514
      %v523 = vadd.f32 %v503, %v514
      %v524 = vadd.f32 %v504, %v514
      %v525 = vadd.f32 %v505, %v514
      %v526 = vadd.f32 %v506, %v514
      %v527 = vadd.f32 %v507, %v514
      %v528 = vadd.f32 %v508, %v514
      %v529 = vadd.f32 %v509, %v514
      %v530 = vadd.f32 %v510, %v514
      %v531 = vadd.f32 %v511, %v514
      %v532 = vpack.c.bf16 %v517, %v516
      %v533 = vpack.c.bf16 %v519, %v518
      %v534 = vpack.c.bf16 %v521, %v520
      %v535 = vpack.c.bf16 %v523, %v522
      %v536 = vpack.c.bf16 %v525, %v524
      %v537 = vpack.c.bf16 %v527, %v526
      %v538 = vpack.c.bf16 %v529, %v528
      %v539 = vpack.c.bf16 %v531, %v530
      %v540 = vld [vmem:[#allocation8] sm:$0xf]
      %v541 = vld [vmem:[#allocation8 + $0x4] sm:$0xf]
      %v542 = vld [vmem:[#allocation8 + $0x8] sm:$0xf]
      %v543 = vld [vmem:[#allocation8 + $0xc] sm:$0xf]
      %v544 = vld [vmem:[#allocation8 + $0x10] sm:$0xf]
      %v545 = vld [vmem:[#allocation8 + $0x14] sm:$0xf]
      %v546 = vld [vmem:[#allocation8 + $0x18] sm:$0xf]
      %v547 = vld [vmem:[#allocation8 + $0x1c] sm:$0xf]
      %v548 = vld [vmem:[#allocation8 + $0x20] sm:$0xf]
      %v549 = vld [vmem:[#allocation8 + $0x24] sm:$0xf]
      %v550 = vld [vmem:[#allocation8 + $0x28] sm:$0xf]
      %v551 = vld [vmem:[#allocation8 + $0x2c] sm:$0xf]
      %v552 = vld [vmem:[#allocation8 + $0x30] sm:$0xf]
      %v553 = vld [vmem:[#allocation8 + $0x34] sm:$0xf]
      %v554 = vld [vmem:[#allocation8 + $0x38] sm:$0xf]
      %v555 = vld [vmem:[#allocation8 + $0x3c] sm:$0xf]
      %v556 = vld [vmem:[%s4] sm:$0x1]
      %v558 = vperm.slane %v556, 0
      %v576 = vunpack.c.l.b16 %v540
      %v577 = vunpack.c.l.b16 %v541
      %v578 = vunpack.c.l.b16 %v542
      %v579 = vunpack.c.l.b16 %v543
      %v580 = vunpack.c.l.b16 %v544
      %v581 = vunpack.c.l.b16 %v545
      %v582 = vunpack.c.l.b16 %v546
      %v583 = vunpack.c.l.b16 %v547
      %v584 = vunpack.c.l.b16 %v548
      %v585 = vunpack.c.l.b16 %v549
      %v586 = vunpack.c.l.b16 %v550
      %v587 = vunpack.c.l.b16 %v551
      %v588 = vunpack.c.l.b16 %v552
      %v589 = vunpack.c.l.b16 %v553
      %v590 = vunpack.c.l.b16 %v554
      %v591 = vunpack.c.l.b16 %v555
      %v592 = vpack.c.b16 %v577, %v576
      %v593 = vpack.c.b16 %v579, %v578
      %v594 = vpack.c.b16 %v581, %v580
      %v595 = vpack.c.b16 %v583, %v582
      %v596 = vpack.c.b16 %v585, %v584
      %v597 = vpack.c.b16 %v587, %v586
      %v598 = vpack.c.b16 %v589, %v588
      %v599 = vpack.c.b16 %v591, %v590
      %608 = vmatpush.bf16.msra.mxu0 %v599
      %609 = vmatpush.bf16.msra.mxu0 %v598
      %610 = vmatpush.bf16.msra.mxu0 %v597
      %611 = vmatpush.bf16.msra.mxu0 %v596
      %612 = vmatpush.bf16.msra.mxu0 %v595
      %613 = vmatpush.bf16.msra.mxu0 %v594
      %614 = vmatpush.bf16.msra.mxu0 %v593
      %615 = vmatpush.bf16.msra.mxu0 %v592
      %616 = vmatmul.bf16.gmra.mxu0 %v532
      %v617 = vpop.f32.mrf.mxu0
      %v618 = vadd.f32 %v558, %v617
      %v619 = vpop.f32.mrf.mxu0
      %v620 = vadd.f32 %v558, %v619
      %621 = vmatmul.bf16.gmra.mxu0 %v533
      %v622 = vpop.f32.mrf.mxu0
      %v623 = vadd.f32 %v558, %v622
      %v624 = vpop.f32.mrf.mxu0
      %v625 = vadd.f32 %v558, %v624
      %626 = vmatmul.bf16.gmra.mxu0 %v534
      %v627 = vpop.f32.mrf.mxu0
      %v628 = vadd.f32 %v558, %v627
      %v629 = vpop.f32.mrf.mxu0
      %v630 = vadd.f32 %v558, %v629
      %631 = vmatmul.bf16.gmra.mxu0 %v535
      %v632 = vpop.f32.mrf.mxu0
      %v633 = vadd.f32 %v558, %v632
      %v634 = vpop.f32.mrf.mxu0
      %v635 = vadd.f32 %v558, %v634
      %636 = vmatmul.bf16.gmra.mxu0 %v536
      %v637 = vpop.f32.mrf.mxu0
      %v638 = vadd.f32 %v558, %v637
      %v639 = vpop.f32.mrf.mxu0
      %v640 = vadd.f32 %v558, %v639
      %641 = vmatmul.bf16.gmra.mxu0 %v537
      %v642 = vpop.f32.mrf.mxu0
      %v643 = vadd.f32 %v558, %v642
      %v644 = vpop.f32.mrf.mxu0
      %v645 = vadd.f32 %v558, %v644
      %646 = vmatmul.bf16.gmra.mxu0 %v538
      %v647 = vpop.f32.mrf.mxu0
      %v648 = vadd.f32 %v558, %v647
      %v649 = vpop.f32.mrf.mxu0
      %v650 = vadd.f32 %v558, %v649
      %651 = vmatmul.bf16.gmra.mxu0 %v539
      %v652 = vpop.f32.mrf.mxu0
      %v653 = vadd.f32 %v558, %v652
      %v654 = vpop.f32.mrf.mxu0
      %v655 = vadd.f32 %v558, %v654
      %656 = vdwg.mxu0
      %v657 = vmax.f32 %v618, 0.0
      %v658 = vmax.f32 %v620, 0.0
      %v659 = vmax.f32 %v623, 0.0
      %v660 = vmax.f32 %v625, 0.0
      %v661 = vmax.f32 %v628, 0.0
      %v662 = vmax.f32 %v630, 0.0
      %v663 = vmax.f32 %v633, 0.0
      %v664 = vmax.f32 %v635, 0.0
      %v665 = vmax.f32 %v638, 0.0
      %v666 = vmax.f32 %v640, 0.0
      %v667 = vmax.f32 %v643, 0.0
      %v668 = vmax.f32 %v645, 0.0
      %v669 = vmax.f32 %v648, 0.0
      %v670 = vmax.f32 %v650, 0.0
      %v671 = vmax.f32 %v653, 0.0
      %v672 = vmax.f32 %v655, 0.0
      %v673 = vpack.c.bf16 %v657, %v657
      %v674 = vpack.c.bf16 %v658, %v658
      %v675 = vpack.c.bf16 %v659, %v659
      %v676 = vpack.c.bf16 %v660, %v660
      %v677 = vpack.c.bf16 %v661, %v661
      %v678 = vpack.c.bf16 %v662, %v662
      %v679 = vpack.c.bf16 %v663, %v663
      %v680 = vpack.c.bf16 %v664, %v664
      %v681 = vpack.c.bf16 %v665, %v665
      %v682 = vpack.c.bf16 %v666, %v666
      %v683 = vpack.c.bf16 %v667, %v667
      %v684 = vpack.c.bf16 %v668, %v668
      %v685 = vpack.c.bf16 %v669, %v669
      %v686 = vpack.c.bf16 %v670, %v670
      %v687 = vpack.c.bf16 %v671, %v671
      %v688 = vpack.c.bf16 %v672, %v672
      %689 = vst [vmem:[#allocation2] sm:$0xf] %v673
      %690 = vst [vmem:[#allocation2 + $0x4] sm:$0xf] %v674
      %691 = vst [vmem:[#allocation2 + $0x8] sm:$0xf] %v675
      %692 = vst [vmem:[#allocation2 + $0xc] sm:$0xf] %v676
      %693 = vst [vmem:[#allocation2 + $0x10] sm:$0xf] %v677
      %694 = vst [vmem:[#allocation2 + $0x14] sm:$0xf] %v678
      %695 = vst [vmem:[#allocation2 + $0x18] sm:$0xf] %v679
      %696 = vst [vmem:[#allocation2 + $0x1c] sm:$0xf] %v680
      %697 = vst [vmem:[#allocation2 + $0x20] sm:$0xf] %v681
      %698 = vst [vmem:[#allocation2 + $0x24] sm:$0xf] %v682
      %699 = vst [vmem:[#allocation2 + $0x28] sm:$0xf] %v683
      %700 = vst [vmem:[#allocation2 + $0x2c] sm:$0xf] %v684
      %701 = vst [vmem:[#allocation2 + $0x30] sm:$0xf] %v685
      %702 = vst [vmem:[#allocation2 + $0x34] sm:$0xf] %v686
      %703 = vst [vmem:[#allocation2 + $0x38] sm:$0xf] %v687
      %704 = vst [vmem:[#allocation2 + $0x3c] sm:$0xf] %v688
    $region49: #{tpu_custom_call.1} parent=1 // pred_fallthru
      _
    %v705 = vld [vmem:[#allocation2] sm:$0xf]
    %v706 = vld [vmem:[#allocation2 + $0x4] sm:$0xf]
    %v707 = vld [vmem:[#allocation2 + $0x8] sm:$0xf]
    %v708 = vld [vmem:[#allocation2 + $0xc] sm:$0xf]
    %v709 = vld [vmem:[#allocation2 + $0x10] sm:$0xf]
    %v710 = vld [vmem:[#allocation2 + $0x14] sm:$0xf]
    %v711 = vld [vmem:[#allocation2 + $0x18] sm:$0xf]
    %v712 = vld [vmem:[#allocation2 + $0x1c] sm:$0xf]
    %v713 = vld [vmem:[#allocation2 + $0x20] sm:$0xf]
    %v714 = vld [vmem:[#allocation2 + $0x24] sm:$0xf]
    %v715 = vld [vmem:[#allocation2 + $0x28] sm:$0xf]
    %v716 = vld [vmem:[#allocation2 + $0x2c] sm:$0xf]
    %v717 = vld [vmem:[#allocation2 + $0x30] sm:$0xf]
    %v718 = vld [vmem:[#allocation2 + $0x34] sm:$0xf]
    %v719 = vld [vmem:[#allocation2 + $0x38] sm:$0xf]
    %v720 = vld [vmem:[#allocation2 + $0x3c] sm:$0xf]
    %v721 = vld [vmem:[#allocation9] sm:$0xf]
    %v722 = vld [vmem:[#allocation9 + $0x4] sm:$0xf]
    %v723 = vld [vmem:[#allocation9 + $0x8] sm:$0xf]
    %v724 = vld [vmem:[#allocation9 + $0xc] sm:$0xf]
    %v725 = vld [vmem:[#allocation9 + $0x10] sm:$0xf]
    %v726 = vld [vmem:[#allocation9 + $0x14] sm:$0xf]
    %v727 = vld [vmem:[#allocation9 + $0x18] sm:$0xf]
    %v728 = vld [vmem:[#allocation9 + $0x1c] sm:$0xf]
    %v729 = vld [vmem:[#allocation9 + $0x20] sm:$0xf]
    %v730 = vld [vmem:[#allocation9 + $0x24] sm:$0xf]
    %v731 = vld [vmem:[#allocation9 + $0x28] sm:$0xf]
    %v732 = vld [vmem:[#allocation9 + $0x2c] sm:$0xf]
    %v733 = vld [vmem:[#allocation9 + $0x30] sm:$0xf]
    %v734 = vld [vmem:[#allocation9 + $0x34] sm:$0xf]
    %v735 = vld [vmem:[#allocation9 + $0x38] sm:$0xf]
    %v736 = vld [vmem:[#allocation9 + $0x3c] sm:$0xf]
    %v737 = vld [vmem:[%s6] sm:$0x1]
    %v739 = vperm.slane %v737, 0
    %v757 = vunpack.c.l.b16 %v705
    %v758 = vunpack.c.l.b16 %v706
    %v759 = vunpack.c.l.b16 %v707
    %v760 = vunpack.c.l.b16 %v708
    %v761 = vunpack.c.l.b16 %v709
    %v762 = vunpack.c.l.b16 %v710
    %v763 = vunpack.c.l.b16 %v711
    %v764 = vunpack.c.l.b16 %v712
    %v765 = vunpack.c.l.b16 %v713
    %v766 = vunpack.c.l.b16 %v714
    %v767 = vunpack.c.l.b16 %v715
    %v768 = vunpack.c.l.b16 %v716
    %v769 = vunpack.c.l.b16 %v717
    %v770 = vunpack.c.l.b16 %v718
    %v771 = vunpack.c.l.b16 %v719
    %v772 = vunpack.c.l.b16 %v720
    %v773 = vpack.c.b16 %v758, %v757
    %v774 = vpack.c.b16 %v760, %v759
    %v775 = vpack.c.b16 %v762, %v761
    %v776 = vpack.c.b16 %v764, %v763
    %v777 = vpack.c.b16 %v766, %v765
    %v778 = vpack.c.b16 %v768, %v767
    %v779 = vpack.c.b16 %v770, %v769
    %v780 = vpack.c.b16 %v772, %v771
    %v805 = vunpack.c.l.b16 %v721
    %v806 = vunpack.c.l.b16 %v722
    %v807 = vunpack.c.l.b16 %v723
    %v808 = vunpack.c.l.b16 %v724
    %v809 = vunpack.c.l.b16 %v725
    %v810 = vunpack.c.l.b16 %v726
    %v811 = vunpack.c.l.b16 %v727
    %v812 = vunpack.c.l.b16 %v728
    %v813 = vunpack.c.l.b16 %v729
    %v814 = vunpack.c.l.b16 %v730
    %v815 = vunpack.c.l.b16 %v731
    %v816 = vunpack.c.l.b16 %v732
    %v817 = vunpack.c.l.b16 %v733
    %v818 = vunpack.c.l.b16 %v734
    %v819 = vunpack.c.l.b16 %v735
    %v820 = vunpack.c.l.b16 %v736
    %v821 = vpack.c.b16 %v806, %v805
    %v822 = vpack.c.b16 %v808, %v807
    %v823 = vpack.c.b16 %v810, %v809
    %v824 = vpack.c.b16 %v812, %v811
    %v825 = vpack.c.b16 %v814, %v813
    %v826 = vpack.c.b16 %v816, %v815
    %v827 = vpack.c.b16 %v818, %v817
    %v828 = vpack.c.b16 %v820, %v819
    %837 = vmatpush.bf16.msra.mxu0 %v828
    %838 = vmatpush.bf16.msra.mxu0 %v827
    %839 = vmatpush.bf16.msra.mxu0 %v826
    %840 = vmatpush.bf16.msra.mxu0 %v825
    %841 = vmatpush.bf16.msra.mxu0 %v824
    %842 = vmatpush.bf16.msra.mxu0 %v823
    %843 = vmatpush.bf16.msra.mxu0 %v822
    %844 = vmatpush.bf16.msra.mxu0 %v821
    %845 = vmatmul.bf16.gmra.mxu0 %v773
    %v846 = vpop.f32.mrf.mxu0
    %v847 = vadd.f32 %v739, %v846
    %v848 = vpop.f32.mrf.mxu0
    %v849 = vadd.f32 %v739, %v848
    %850 = vmatmul.bf16.gmra.mxu0 %v774
    %v851 = vpop.f32.mrf.mxu0
    %v852 = vadd.f32 %v739, %v851
    %v853 = vpop.f32.mrf.mxu0
    %v854 = vadd.f32 %v739, %v853
    %855 = vmatmul.bf16.gmra.mxu0 %v775
    %v856 = vpop.f32.mrf.mxu0
    %v857 = vadd.f32 %v739, %v856
    %v858 = vpop.f32.mrf.mxu0
    %v859 = vadd.f32 %v739, %v858
    %860 = vmatmul.bf16.gmra.mxu0 %v776
    %v861 = vpop.f32.mrf.mxu0
    %v862 = vadd.f32 %v739, %v861
    %v863 = vpop.f32.mrf.mxu0
    %v864 = vadd.f32 %v739, %v863
    %865 = vmatmul.bf16.gmra.mxu0 %v777
    %v866 = vpop.f32.mrf.mxu0
    %v867 = vadd.f32 %v739, %v866
    %v868 = vpop.f32.mrf.mxu0
    %v869 = vadd.f32 %v739, %v868
    %870 = vmatmul.bf16.gmra.mxu0 %v778
    %v871 = vpop.f32.mrf.mxu0
    %v872 = vadd.f32 %v739, %v871
    %v873 = vpop.f32.mrf.mxu0
    %v874 = vadd.f32 %v739, %v873
    %875 = vmatmul.bf16.gmra.mxu0 %v779
    %v876 = vpop.f32.mrf.mxu0
    %v877 = vadd.f32 %v739, %v876
    %v878 = vpop.f32.mrf.mxu0
    %v879 = vadd.f32 %v739, %v878
    %880 = vmatmul.bf16.gmra.mxu0 %v780
    %v881 = vpop.f32.mrf.mxu0
    %v882 = vadd.f32 %v739, %v881
    %v883 = vpop.f32.mrf.mxu0
    %v884 = vadd.f32 %v739, %v883
    %885 = vdwg.mxu0
    %886 = vst [vmem:[#allocation11] sm:$0xff] %v847
    %887 = vst [vmem:[#allocation11 + $0x8] sm:$0xff] %v849
    %888 = vst [vmem:[#allocation11 + $0x10] sm:$0xff] %v852
    %889 = vst [vmem:[#allocation11 + $0x18] sm:$0xff] %v854
    %890 = vst [vmem:[#allocation11 + $0x20] sm:$0xff] %v857
    %891 = vst [vmem:[#allocation11 + $0x28] sm:$0xff] %v859
    %892 = vst [vmem:[#allocation11 + $0x30] sm:$0xff] %v862
    %893 = vst [vmem:[#allocation11 + $0x38] sm:$0xff] %v864
    %894 = vst [vmem:[#allocation11 + $0x40] sm:$0xff] %v867
    %895 = vst [vmem:[#allocation11 + $0x48] sm:$0xff] %v869
    %896 = vst [vmem:[#allocation11 + $0x50] sm:$0xff] %v872
    %897 = vst [vmem:[#allocation11 + $0x58] sm:$0xff] %v874
    %898 = vst [vmem:[#allocation11 + $0x60] sm:$0xff] %v877
    %899 = vst [vmem:[#allocation11 + $0x68] sm:$0xff] %v879
    %900 = vst [vmem:[#allocation11 + $0x70] sm:$0xff] %v882
    %901 = vst [vmem:[#allocation11 + $0x78] sm:$0xff] %v884
    // Predicated region
    $region50: #{tpu_custom_call.1} parent=1 // pred_check
      _
    $region51: #{tpu_custom_call.1} parent=1 // pred_check_branch
      %903 = sbr.rel (0) target = $region53
    $region52: #{tpu_custom_call.1} parent=1 // pred_region
      %905 = vsyncadd [#allocation5], 0
      %s906 = sshll.u32 [#allocation11], 4
      %s907 = int_to_ptr.vmem [resolvable:$true] %s906
      %s908 = sshll.u32 %s7, 4
      %s909 = int_to_ptr.hbm [resolvable:$true] %s908
      %914 = dma.vmem_to_hbm [thread:$0]  %s907, 2048, %s909, [#allocation5], 128, 128, 8
    $region53: #{tpu_custom_call.1} parent=1 // pred_fallthru
      _
    // Predicated region
    $region54: #{tpu_custom_call.1} parent=1 // pred_check
      _
    $region55: #{tpu_custom_call.1} parent=1 // pred_check_branch
      %916 = sbr.rel (0) target = $region57
    $region56: #{tpu_custom_call.1} parent=1 // pred_region
      %918 = dma.done [#allocation5], 2048
    $region57: #{tpu_custom_call.1} parent=1 // pred_fallthru
      _
    %919 = vsyncpa [#allocation4], 1
    %920 = vsyncpa [#allocation7], 1
    %921 = vsyncpa [#allocation10], 1
    %922 = vsyncpa [#allocation5], 1

</llo_original>
